<compile_context>
chip_gen: v7x
topology: tpu7x:2x2x1
jax: 0.10.0
libtpu: 0.0.40
codegen_flags: <defaults>
</compile_context>

<pallas_src>
import functools

import jax
import jax.numpy as jnp
from jax.experimental import pallas as pl
from jax.experimental.pallas import tpu as pltpu

# ----------------------------- model hyper-params -----------------------------
CAMERA_NAME = "camera0"
DIM_X = 4                       # latent / action dim
HIDDEN = 32                     # MLP hidden width
C_IMG, H_IMG, W_IMG = 3, 16, 16
P_IMG = C_IMG * H_IMG * W_IMG   # flattened pixels per frame
BETA = 1.0

_VMEM = pl.BlockSpec(memory_space=pltpu.MemorySpace.VMEM)

# rows of the packed (16, 128) small-parameter tile
_ROW_ENC_B1 = 0      # enc_b1               (hidden lanes)
_ROW_ENC_BH = 1      # [enc_bloc ++ enc_braw]  (2*dim_x lanes)
_ROW_DEC_B1 = 2      # dec_b1               (hidden lanes)
_ROW_A = 3           # diag A               (dim_x lanes)
_ROW_B = 4           # diag B
_ROW_C = 5           # diag C
_ROW_DW1 = 6         # rows 6..6+dim_x-1 : dec_w1[k, :] (hidden lanes each)


# --------------------------------- fused kernel --------------------------------
def _nvae_fused_kernel(img_ref, eps_ref, act_ref, dti_ref,
                       ew1_ref, ewh_ref, dw2_ref, db2_ref, small_ref,
                       out_ref, *, t_len, batch, dim_x, hidden, beta):
    """Entire NewtonianVAE forward (all T steps) in one kernel invocation."""
    nb = (t_len - 2) * batch            # rows belonging to loss steps t = 2..T-1

    # one packed DMA for all tiny parameters; static slices of the loaded tile
    small = small_ref[...]                                          # (16, 128)
    enc_b1 = small[_ROW_ENC_B1:_ROW_ENC_B1 + 1, 0:hidden]
    enc_bh = small[_ROW_ENC_BH:_ROW_ENC_BH + 1, 0:2 * dim_x]
    dec_b1 = small[_ROW_DEC_B1:_ROW_DEC_B1 + 1, 0:hidden]
    a_diag = small[_ROW_A:_ROW_A + 1, 0:dim_x]
    b_diag = small[_ROW_B:_ROW_B + 1, 0:dim_x]
    c_diag = small[_ROW_C:_ROW_C + 1, 0:dim_x]

    # ---- q(x|I): encoder MLP over all T*B frames. bf16 operands on the MXU,
    #      f32 accumulation; img_ref is consumed at the dot and NOT kept live.
    h = jnp.dot(img_ref[...].astype(jnp.bfloat16), ew1_ref[...],
                preferred_element_type=jnp.float32) + enc_b1
    h = jnp.maximum(h, 0.0)
    # fused loc/raw head: single (HIDDEN, 2*DIM_X) matmul, split statically
    head = jnp.dot(h, ewh_ref[...], preferred_element_type=jnp.float32) + enc_bh
    loc = head[:, 0:dim_x]
    raw = head[:, dim_x:2 * dim_x]
    scale = jnp.exp(raw)
    x_q = loc + scale * eps_ref[...]                 # reparameterized sample (T*B, D)

    # ---- Newtonian dynamics, vectorized over t = 2..T-1 (static B-row windows) ----
    x_tn1 = x_q[batch:batch + nb, :]                 # x_{t-1}
    x_tn2 = x_q[0:nb, :]                             # x_{t-2}
    x_q_t = x_q[2 * batch:, :]                       # x_t
    loc_t = loc[2 * batch:, :]
    raw_t = raw[2 * batch:, :]
    scale_t = scale[2 * batch:, :]
    u_tn1 = act_ref[...]                             # action[t] rows (nb, D)
    dt = dti_ref[:, 0:1]                             # delta[t]       (nb, 1)
    inv_dt = dti_ref[:, 1:2]                         # 1/delta[t]     (nb, 1)

    v_tn1 = (x_tn1 - x_tn2) * inv_dt
    v_t = v_tn1 + dt * (a_diag * x_tn1 + b_diag * v_tn1 + c_diag * u_tn1)
    x_p_mu = x_tn1 + dt * v_t                        # prior mean, sigma_p = 1

    # ---- KL( N(loc, scale) || N(x_p_mu, 1) ): -log(scale) taken from raw directly
    kl_el = -raw_t + 0.5 * (scale_t * scale_t + (loc_t - x_p_mu) ** 2) - 0.5
    e_kl_sum = jnp.sum(jnp.sum(kl_el, axis=1, keepdims=True),
                       axis=0, keepdims=True) / batch                    # (1, 1)

    # ---- p(I|x): layer-1 (K=4) as VPU broadcast-FMAs, layer-2 on MXU (bf16) ----
    hd = dec_b1 + x_q_t[:, 0:1] * small[_ROW_DW1:_ROW_DW1 + 1, 0:hidden]
    for k in range(1, dim_x):
        hd = hd + x_q_t[:, k:k + 1] * small[_ROW_DW1 + k:_ROW_DW1 + k + 1, 0:hidden]
    hd = jnp.maximum(hd, 0.0)
    rec = jnp.dot(hd.astype(jnp.bfloat16), dw2_ref[...],
                  preferred_element_type=jnp.float32) + db2_ref[...]

    # re-read the loss-step image rows from VMEM instead of keeping `img` live
    diff = img_ref[2 * batch:, :] - rec
    sq = jnp.sum(jnp.sum(diff * diff, axis=1, keepdims=True), axis=0, keepdims=True)
    e_ll_sum = -0.5 * sq / batch                     # Gaussian log-lik (up to const)

    beta_kl = beta * e_kl_sum
    e_sum = e_ll_sum - beta_kl

    # ---- pack all loss scalars into a single lane-dense (1, 128) output row ----
    lane = jax.lax.broadcasted_iota(jnp.int32, (1, 128), 1)
    out = jnp.where(lane == 0, e_ll_sum, 0.0)
    out = jnp.where(lane == 1, e_kl_sum, out)
    out = jnp.where(lane == 2, beta_kl, out)
    out = jnp.where(lane == 3, e_sum, out)
    out_ref[...] = out


# ------------------------------ host-side helpers -------------------------------
def _pack_small_params(params, *, dim_x, hidden):
    """Pack all tiny parameters + dec_w1 into one lane-dense (16, 128) f32 tile."""
    small = jnp.zeros((16, 128), jnp.float32)
    small = small.at[_ROW_ENC_B1, 0:hidden].set(params["enc_b1"][0])
    bh = jnp.concatenate([params["enc_bloc"][0], params["enc_braw"][0]])
    small = small.at[_ROW_ENC_BH, 0:2 * dim_x].set(bh)
    small = small.at[_ROW_DEC_B1, 0:hidden].set(params["dec_b1"][0])
    small = small.at[_ROW_A, 0:dim_x].set(params["A"][0])
    small = small.at[_ROW_B, 0:dim_x].set(params["B"][0])
    small = small.at[_ROW_C, 0:dim_x].set(params["C"][0])
    small = small.at[_ROW_DW1:_ROW_DW1 + dim_x, 0:hidden].set(params["dec_w1"])
    return small


def newtonian_vae_forward(params, batchdata, eps, *, beta=BETA):
    """Mirrors NewtonianVAE.forward: returns (L, losses)."""
    action = batchdata["action"]                       # (T, B, D)
    delta = batchdata["delta"]                         # (T,)
    images = batchdata["camera"][CAMERA_NAME]          # (T, B, C, H, W)
    t_len, batch, dim_x = action.shape
    p_img = images.shape[2] * images.shape[3] * images.shape[4]
    hidden = params["enc_w1"].shape[1]
    nb = (t_len - 2) * batch

    # batch must be a multiple of 8 so the static B-row time-shift windows stay
    # aligned to the f32 (8, 128) sublane tiling (perf; results are correct anyway)
    assert batch % 8 == 0, "batch must be a multiple of 8 for aligned row windows"
    assert t_len >= 3

    img_flat = images.reshape(t_len * batch, p_img).astype(jnp.float32)
    eps_flat = eps.reshape(t_len * batch, dim_x).astype(jnp.float32)
    act_loss = action[2:].reshape(nb, dim_x).astype(jnp.float32)
    dt_col = jnp.broadcast_to(
        delta[2:].reshape(t_len - 2, 1, 1).astype(jnp.float32),
        (t_len - 2, batch, 1)).reshape(nb, 1)
    dti = jnp.concatenate([dt_col, 1.0 / dt_col], axis=1)      # (nb, 2) = [dt, 1/dt]

    enc_w1_bf16 = params["enc_w1"].astype(jnp.bfloat16)        # big matmul operands
    dec_w2_bf16 = params["dec_w2"].astype(jnp.bfloat16)        # go to MXU as bf16
    enc_whead = jnp.concatenate([params["enc_wloc"], params["enc_wraw"]], axis=1)
    small = _pack_small_params(params, dim_x=dim_x, hidden=hidden)

    kernel = functools.partial(_nvae_fused_kernel, t_len=t_len, batch=batch,
                               dim_x=dim_x, hidden=hidden, beta=float(beta))
    packed = pl.pallas_call(
        kernel,
        out_shape=jax.ShapeDtypeStruct((1, 128), jnp.float32),
        in_specs=[_VMEM] * 9,
        out_specs=_VMEM,
    )(img_flat, eps_flat, act_loss, dti,
      enc_w1_bf16, enc_whead, dec_w2_bf16, params["dec_b2"], small)

    e_ll_sum = packed[0, 0]
    e_kl_sum = packed[0, 1]
    beta_kl = packed[0, 2]
    e_sum = packed[0, 3]

    L = -(e_sum / t_len)
    losses = {
        f"{CAMERA_NAME} Loss": -e_ll_sum / t_len,
        "KL Loss": e_kl_sum / t_len,
        "Beta KL Loss": beta_kl / t_len,
    }
    return L, losses


# ------------------------------ parameter init ----------------------------------
def init_params(key, *, dim_x=DIM_X, hidden=HIDDEN, p_img=P_IMG):
    ks = jax.random.split(key, 8)
    s = 0.05
    return {
        "enc_w1": s * jax.random.normal(ks[0], (p_img, hidden), jnp.float32),
        "enc_b1": jnp.zeros((1, hidden), jnp.float32),
        "enc_wloc": s * jax.random.normal(ks[1], (hidden, dim_x), jnp.float32),
        "enc_bloc": jnp.zeros((1, dim_x), jnp.float32),
        "enc_wraw": s * jax.random.normal(ks[2], (hidden, dim_x), jnp.float32),
        "enc_braw": jnp.full((1, dim_x), -1.0, jnp.float32),
        "dec_w1": s * jax.random.normal(ks[3], (dim_x, hidden), jnp.float32),
        "dec_b1": jnp.zeros((1, hidden), jnp.float32),
        "dec_w2": s * jax.random.normal(ks[4], (hidden, p_img), jnp.float32),
        "dec_b2": jnp.zeros((1, p_img), jnp.float32),
        "A": -0.1 + 0.02 * jax.random.normal(ks[5], (1, dim_x), jnp.float32),
        "B": -0.1 + 0.02 * jax.random.normal(ks[6], (1, dim_x), jnp.float32),
        "C": 1.0 + 0.02 * jax.random.normal(ks[7], (1, dim_x), jnp.float32),
    }


# ------------------- pure-JAX reference (per-timestep loop) ----------------------
# Runs at Precision.HIGHEST in f32; the kernel uses bf16 operands (f32 accumulate)
# for its two large matmuls, so the expected relative error budget is ~1e-3,
# well inside the 5e-2 tolerance below.
def _forward_reference(params, batchdata, eps, *, beta=BETA):
    action = batchdata["action"]
    delta = batchdata["delta"]
    images = batchdata["camera"][CAMERA_NAME]
    t_len, bsz, _ = action.shape
    hp = jax.lax.Precision.HIGHEST

    def q_enc(I):
        flat = I.reshape(bsz, -1)
        h = jax.nn.relu(jnp.dot(flat, params["enc_w1"], precision=hp) + params["enc_b1"])
        loc = jnp.dot(h, params["enc_wloc"], precision=hp) + params["enc_bloc"]
        raw = jnp.dot(h, params["enc_wraw"], precision=hp) + params["enc_braw"]
        return loc, jnp.exp(raw)

    def p_dec(x):
        h = jax.nn.relu(jnp.dot(x, params["dec_w1"], precision=hp) + params["dec_b1"])
        return jnp.dot(h, params["dec_w2"], precision=hp) + params["dec_b2"]

    E_sum = E_ll_sum = E_kl_sum = beta_kl = 0.0
    x_q_tn1 = x_q_tn2 = None
    for t in range(t_len):
        loc, scale = q_enc(images[t])
        x_q_t = loc + scale * eps[t]
        if t >= 2:
            dt = delta[t]
            v_tn1 = (x_q_tn1 - x_q_tn2) / dt
            v_t = v_tn1 + dt * (params["A"] * x_q_tn1 + params["B"] * v_tn1
                                + params["C"] * action[t])
            x_p_mu = x_q_tn1 + dt * v_t
            kl = jnp.sum(-jnp.log(scale)
                         + 0.5 * (scale ** 2 + (loc - x_p_mu) ** 2) - 0.5) / bsz
            rec = p_dec(x_q_t)
            e_ll = -0.5 * jnp.sum((images[t].reshape(bsz, -1) - rec) ** 2) / bsz
            E_sum += e_ll - beta * kl
            E_ll_sum += e_ll
            E_kl_sum += kl
            beta_kl += beta * kl
        x_q_tn2 = x_q_tn1
        x_q_tn1 = x_q_t
    L = -(E_sum / t_len)
    losses = {
        f"{CAMERA_NAME} Loss": -E_ll_sum / t_len,
        "KL Loss": E_kl_sum / t_len,
        "Beta KL Loss": beta_kl / t_len,
    }
    return L, losses


# ------------------------------------ main ---------------------------------------
if __name__ == "__main__":
    key = jax.random.PRNGKey(0)
    k_par, k_act, k_del, k_img, k_eps = jax.random.split(key, 5)

    # B chosen as a multiple of 8 so the in-kernel time-shift row windows are
    # aligned to the f32 (8, 128) sublane tiling.
    T, B = 8, 8
    params = init_params(k_par)
    batchdata = {
        "action": jax.random.normal(k_act, (T, B, DIM_X), jnp.float32),
        "delta": jax.random.uniform(k_del, (T,), jnp.float32, minval=0.05, maxval=0.15),
        "camera": {
            CAMERA_NAME: jax.random.uniform(k_img, (T, B, C_IMG, H_IMG, W_IMG),
                                            jnp.float32),
        },
    }
    eps = jax.random.normal(k_eps, (T, B, DIM_X), jnp.float32)

    fwd = jax.jit(newtonian_vae_forward)
    L, losses = fwd(params, batchdata, eps)
    jax.block_until_ready(L)
    for v in losses.values():
        jax.block_until_ready(v)

    # Sanity check against a pure-JAX per-timestep reference of the same forward.
    L_ref, losses_ref = _forward_reference(params, batchdata, eps, beta=BETA)
    assert jnp.allclose(L, L_ref, rtol=5e-2, atol=5e-2), (float(L), float(L_ref))
    for name in losses:
        assert jnp.allclose(losses[name], losses_ref[name], rtol=5e-2, atol=5e-2), (
            name, float(losses[name]), float(losses_ref[name]))

    print("KERNEL_OK")
</pallas_src>

<mosaic_0001>
module attributes {stable_mosaic.version = 11 : i64} {
  func.func @_nvae_fused_kernel(%arg0: memref<64x768xf32, #tpu.memory_space<vmem>>, %arg1: memref<64x4xf32, #tpu.memory_space<vmem>>, %arg2: memref<48x4xf32, #tpu.memory_space<vmem>>, %arg3: memref<48x2xf32, #tpu.memory_space<vmem>>, %arg4: memref<768x32xbf16, #tpu.memory_space<vmem>>, %arg5: memref<32x8xf32, #tpu.memory_space<vmem>>, %arg6: memref<32x768xbf16, #tpu.memory_space<vmem>>, %arg7: memref<1x768xf32, #tpu.memory_space<vmem>>, %arg8: memref<16x128xf32, #tpu.memory_space<vmem>>, %arg9: memref<1x128xf32, #tpu.memory_space<vmem>>) attributes {dimension_semantics = [], scalar_prefetch = 0 : i64, scratch_operands = 0 : i64, tpu.core_type = #tpu.core_type<tc>} {
    %c0 = arith.constant 0 : index
    %c0_0 = arith.constant 0 : index
    %0 = vector.load %arg8[%c0, %c0_0] : memref<16x128xf32, #tpu.memory_space<vmem>>, vector<16x128xf32>
    %1 = vector.extract_strided_slice %0 {offsets = [0, 0], sizes = [1, 32], strides = [1, 1]} : vector<16x128xf32> to vector<1x32xf32>
    %2 = vector.extract_strided_slice %0 {offsets = [1, 0], sizes = [1, 8], strides = [1, 1]} : vector<16x128xf32> to vector<1x8xf32>
    %3 = vector.extract_strided_slice %0 {offsets = [2, 0], sizes = [1, 32], strides = [1, 1]} : vector<16x128xf32> to vector<1x32xf32>
    %4 = vector.extract_strided_slice %0 {offsets = [3, 0], sizes = [1, 4], strides = [1, 1]} : vector<16x128xf32> to vector<1x4xf32>
    %5 = vector.extract_strided_slice %0 {offsets = [4, 0], sizes = [1, 4], strides = [1, 1]} : vector<16x128xf32> to vector<1x4xf32>
    %6 = vector.extract_strided_slice %0 {offsets = [5, 0], sizes = [1, 4], strides = [1, 1]} : vector<16x128xf32> to vector<1x4xf32>
    %c0_1 = arith.constant 0 : index
    %c0_2 = arith.constant 0 : index
    %7 = vector.load %arg0[%c0_1, %c0_2] : memref<64x768xf32, #tpu.memory_space<vmem>>, vector<64x768xf32>
    %8 = arith.truncf %7 : vector<64x768xf32> to vector<64x768xbf16>
    %c0_3 = arith.constant 0 : index
    %c0_4 = arith.constant 0 : index
    %9 = vector.load %arg4[%c0_3, %c0_4] : memref<768x32xbf16, #tpu.memory_space<vmem>>, vector<768x32xbf16>
    %cst = arith.constant dense<0.000000e+00> : vector<64x32xf32>
    %10 = tpu.matmul %8, %9, %cst {dimension_numbers = #tpu.dot_dimension_numbers<[1], [0], [0], [1], [0, 0, 1, 1], [], []>} : vector<64x768xbf16>, vector<768x32xbf16>, vector<64x32xf32> -> vector<64x32xf32>
    %11 = vector.broadcast %1 : vector<1x32xf32> to vector<64x32xf32>
    %12 = arith.addf %10, %11 : vector<64x32xf32>
    %cst_5 = arith.constant 0.000000e+00 : f32
    %13 = vector.broadcast %cst_5 : f32 to vector<64x32xf32>
    %14 = arith.maximumf %12, %13 : vector<64x32xf32>
    %c0_6 = arith.constant 0 : index
    %c0_7 = arith.constant 0 : index
    %15 = vector.load %arg5[%c0_6, %c0_7] : memref<32x8xf32, #tpu.memory_space<vmem>>, vector<32x8xf32>
    %cst_8 = arith.constant dense<0.000000e+00> : vector<64x8xf32>
    %16 = tpu.matmul %14, %15, %cst_8 {dimension_numbers = #tpu.dot_dimension_numbers<[1], [0], [0], [1], [0, 0, 1, 1], [], []>} : vector<64x32xf32>, vector<32x8xf32>, vector<64x8xf32> -> vector<64x8xf32>
    %17 = vector.broadcast %2 : vector<1x8xf32> to vector<64x8xf32>
    %18 = arith.addf %16, %17 : vector<64x8xf32>
    %19 = vector.extract_strided_slice %18 {offsets = [0, 0], sizes = [64, 4], strides = [1, 1]} : vector<64x8xf32> to vector<64x4xf32>
    %20 = vector.extract_strided_slice %18 {offsets = [0, 4], sizes = [64, 4], strides = [1, 1]} : vector<64x8xf32> to vector<64x4xf32>
    %21 = math.exp %20 : vector<64x4xf32>
    %c0_9 = arith.constant 0 : index
    %c0_10 = arith.constant 0 : index
    %22 = vector.load %arg1[%c0_9, %c0_10] : memref<64x4xf32, #tpu.memory_space<vmem>>, vector<64x4xf32>
    %23 = arith.mulf %21, %22 : vector<64x4xf32>
    %24 = arith.addf %19, %23 : vector<64x4xf32>
    %25 = vector.extract_strided_slice %24 {offsets = [8, 0], sizes = [48, 4], strides = [1, 1]} : vector<64x4xf32> to vector<48x4xf32>
    %26 = vector.extract_strided_slice %24 {offsets = [0, 0], sizes = [48, 4], strides = [1, 1]} : vector<64x4xf32> to vector<48x4xf32>
    %27 = vector.extract_strided_slice %24 {offsets = [16, 0], sizes = [48, 4], strides = [1, 1]} : vector<64x4xf32> to vector<48x4xf32>
    %28 = vector.extract_strided_slice %19 {offsets = [16, 0], sizes = [48, 4], strides = [1, 1]} : vector<64x4xf32> to vector<48x4xf32>
    %29 = vector.extract_strided_slice %20 {offsets = [16, 0], sizes = [48, 4], strides = [1, 1]} : vector<64x4xf32> to vector<48x4xf32>
    %30 = vector.extract_strided_slice %21 {offsets = [16, 0], sizes = [48, 4], strides = [1, 1]} : vector<64x4xf32> to vector<48x4xf32>
    %c0_11 = arith.constant 0 : index
    %c0_12 = arith.constant 0 : index
    %31 = vector.load %arg2[%c0_11, %c0_12] : memref<48x4xf32, #tpu.memory_space<vmem>>, vector<48x4xf32>
    %c0_13 = arith.constant 0 : index
    %c0_14 = arith.constant 0 : index
    %32 = vector.load %arg3[%c0_13, %c0_14] : memref<48x2xf32, #tpu.memory_space<vmem>>, vector<48x1xf32>
    %c0_15 = arith.constant 0 : index
    %c1 = arith.constant 1 : index
    %33 = vector.load %arg3[%c0_15, %c1] : memref<48x2xf32, #tpu.memory_space<vmem>>, vector<48x1xf32>
    %34 = arith.subf %25, %26 : vector<48x4xf32>
    %35 = vector.broadcast %33 : vector<48x1xf32> to vector<48x4xf32>
    %36 = arith.mulf %34, %35 : vector<48x4xf32>
    %37 = vector.broadcast %4 : vector<1x4xf32> to vector<48x4xf32>
    %38 = arith.mulf %37, %25 : vector<48x4xf32>
    %39 = vector.broadcast %5 : vector<1x4xf32> to vector<48x4xf32>
    %40 = arith.mulf %39, %36 : vector<48x4xf32>
    %41 = arith.addf %38, %40 : vector<48x4xf32>
    %42 = vector.broadcast %6 : vector<1x4xf32> to vector<48x4xf32>
    %43 = arith.mulf %42, %31 : vector<48x4xf32>
    %44 = arith.addf %41, %43 : vector<48x4xf32>
    %45 = vector.broadcast %32 : vector<48x1xf32> to vector<48x4xf32>
    %46 = arith.mulf %45, %44 : vector<48x4xf32>
    %47 = arith.addf %36, %46 : vector<48x4xf32>
    %48 = vector.broadcast %32 : vector<48x1xf32> to vector<48x4xf32>
    %49 = arith.mulf %48, %47 : vector<48x4xf32>
    %50 = arith.addf %25, %49 : vector<48x4xf32>
    %cst_16 = arith.constant 0.000000e+00 : f32
    %51 = vector.broadcast %cst_16 : f32 to vector<48x4xf32>
    %52 = arith.subf %51, %29 : vector<48x4xf32>
    %53 = arith.mulf %30, %30 : vector<48x4xf32>
    %54 = arith.subf %28, %50 : vector<48x4xf32>
    %55 = arith.mulf %54, %54 : vector<48x4xf32>
    %56 = arith.addf %53, %55 : vector<48x4xf32>
    %cst_17 = arith.constant 5.000000e-01 : f32
    %57 = vector.broadcast %cst_17 : f32 to vector<48x4xf32>
    %58 = arith.mulf %57, %56 : vector<48x4xf32>
    %59 = arith.addf %52, %58 : vector<48x4xf32>
    %cst_18 = arith.constant 5.000000e-01 : f32
    %60 = vector.broadcast %cst_18 : f32 to vector<48x4xf32>
    %61 = arith.subf %59, %60 : vector<48x4xf32>
    %cst_19 = arith.constant dense<0.000000e+00> : vector<48xf32>
    %62 = vector.multi_reduction <add>, %61, %cst_19 [1] : vector<48x4xf32> to vector<48xf32>
    %63 = vector.shape_cast %62 : vector<48xf32> to vector<48x1xf32>
    %cst_20 = arith.constant dense<0.000000e+00> : vector<1xf32>
    %64 = vector.multi_reduction <add>, %63, %cst_20 [0] : vector<48x1xf32> to vector<1xf32>
    %65 = vector.shape_cast %64 : vector<1xf32> to vector<1x1xf32>
    %cst_21 = arith.constant 8.000000e+00 : f32
    %66 = vector.broadcast %cst_21 : f32 to vector<1x1xf32>
    %67 = arith.divf %65, %66 : vector<1x1xf32>
    %68 = vector.extract_strided_slice %27 {offsets = [0, 0], sizes = [48, 1], strides = [1, 1]} : vector<48x4xf32> to vector<48x1xf32>
    %69 = vector.extract_strided_slice %0 {offsets = [6, 0], sizes = [1, 32], strides = [1, 1]} : vector<16x128xf32> to vector<1x32xf32>
    %70 = vector.broadcast %68 : vector<48x1xf32> to vector<48x32xf32>
    %71 = vector.broadcast %69 : vector<1x32xf32> to vector<48x32xf32>
    %72 = arith.mulf %70, %71 : vector<48x32xf32>
    %73 = vector.broadcast %3 : vector<1x32xf32> to vector<48x32xf32>
    %74 = arith.addf %73, %72 : vector<48x32xf32>
    %75 = vector.extract_strided_slice %27 {offsets = [0, 1], sizes = [48, 1], strides = [1, 1]} : vector<48x4xf32> to vector<48x1xf32>
    %76 = vector.extract_strided_slice %0 {offsets = [7, 0], sizes = [1, 32], strides = [1, 1]} : vector<16x128xf32> to vector<1x32xf32>
    %77 = vector.broadcast %75 : vector<48x1xf32> to vector<48x32xf32>
    %78 = vector.broadcast %76 : vector<1x32xf32> to vector<48x32xf32>
    %79 = arith.mulf %77, %78 : vector<48x32xf32>
    %80 = arith.addf %74, %79 : vector<48x32xf32>
    %81 = vector.extract_strided_slice %27 {offsets = [0, 2], sizes = [48, 1], strides = [1, 1]} : vector<48x4xf32> to vector<48x1xf32>
    %82 = vector.extract_strided_slice %0 {offsets = [8, 0], sizes = [1, 32], strides = [1, 1]} : vector<16x128xf32> to vector<1x32xf32>
    %83 = vector.broadcast %81 : vector<48x1xf32> to vector<48x32xf32>
    %84 = vector.broadcast %82 : vector<1x32xf32> to vector<48x32xf32>
    %85 = arith.mulf %83, %84 : vector<48x32xf32>
    %86 = arith.addf %80, %85 : vector<48x32xf32>
    %87 = vector.extract_strided_slice %27 {offsets = [0, 3], sizes = [48, 1], strides = [1, 1]} : vector<48x4xf32> to vector<48x1xf32>
    %88 = vector.extract_strided_slice %0 {offsets = [9, 0], sizes = [1, 32], strides = [1, 1]} : vector<16x128xf32> to vector<1x32xf32>
    %89 = vector.broadcast %87 : vector<48x1xf32> to vector<48x32xf32>
    %90 = vector.broadcast %88 : vector<1x32xf32> to vector<48x32xf32>
    %91 = arith.mulf %89, %90 : vector<48x32xf32>
    %92 = arith.addf %86, %91 : vector<48x32xf32>
    %cst_22 = arith.constant 0.000000e+00 : f32
    %93 = vector.broadcast %cst_22 : f32 to vector<48x32xf32>
    %94 = arith.maximumf %92, %93 : vector<48x32xf32>
    %95 = arith.truncf %94 : vector<48x32xf32> to vector<48x32xbf16>
    %c0_23 = arith.constant 0 : index
    %c0_24 = arith.constant 0 : index
    %96 = vector.load %arg6[%c0_23, %c0_24] : memref<32x768xbf16, #tpu.memory_space<vmem>>, vector<32x768xbf16>
    %cst_25 = arith.constant dense<0.000000e+00> : vector<48x768xf32>
    %97 = tpu.matmul %95, %96, %cst_25 {dimension_numbers = #tpu.dot_dimension_numbers<[1], [0], [0], [1], [0, 0, 1, 1], [], []>} : vector<48x32xbf16>, vector<32x768xbf16>, vector<48x768xf32> -> vector<48x768xf32>
    %c0_26 = arith.constant 0 : index
    %c0_27 = arith.constant 0 : index
    %98 = vector.load %arg7[%c0_26, %c0_27] : memref<1x768xf32, #tpu.memory_space<vmem>>, vector<1x768xf32>
    %99 = vector.broadcast %98 : vector<1x768xf32> to vector<48x768xf32>
    %100 = arith.addf %97, %99 : vector<48x768xf32>
    %c16 = arith.constant 16 : index
    %c0_28 = arith.constant 0 : index
    %101 = vector.load %arg0[%c16, %c0_28] : memref<64x768xf32, #tpu.memory_space<vmem>>, vector<48x768xf32>
    %102 = arith.subf %101, %100 : vector<48x768xf32>
    %103 = arith.mulf %102, %102 : vector<48x768xf32>
    %cst_29 = arith.constant dense<0.000000e+00> : vector<48xf32>
    %104 = vector.multi_reduction <add>, %103, %cst_29 [1] : vector<48x768xf32> to vector<48xf32>
    %105 = vector.shape_cast %104 : vector<48xf32> to vector<48x1xf32>
    %cst_30 = arith.constant dense<0.000000e+00> : vector<1xf32>
    %106 = vector.multi_reduction <add>, %105, %cst_30 [0] : vector<48x1xf32> to vector<1xf32>
    %107 = vector.shape_cast %106 : vector<1xf32> to vector<1x1xf32>
    %cst_31 = arith.constant -5.000000e-01 : f32
    %108 = vector.broadcast %cst_31 : f32 to vector<1x1xf32>
    %109 = arith.mulf %108, %107 : vector<1x1xf32>
    %cst_32 = arith.constant 8.000000e+00 : f32
    %110 = vector.broadcast %cst_32 : f32 to vector<1x1xf32>
    %111 = arith.divf %109, %110 : vector<1x1xf32>
    %cst_33 = arith.constant 1.000000e+00 : f32
    %112 = vector.broadcast %cst_33 : f32 to vector<1x1xf32>
    %113 = arith.mulf %112, %67 : vector<1x1xf32>
    %114 = arith.subf %111, %113 : vector<1x1xf32>
    %115 = tpu.iota {dimensions = array<i32: 1>} : vector<1x128xi32>
    %c0_i32 = arith.constant 0 : i32
    %116 = vector.broadcast %c0_i32 : i32 to vector<1x128xi32>
    %117 = arith.cmpi eq, %115, %116 : vector<1x128xi32>
    %cst_34 = arith.constant 0.000000e+00 : f32
    %118 = vector.shape_cast %111 : vector<1x1xf32> to vector<1x1xf32>
    %119 = vector.broadcast %118 : vector<1x1xf32> to vector<1x128xf32>
    %120 = vector.broadcast %cst_34 : f32 to vector<1x128xf32>
    %121 = arith.select %117, %119, %120 : vector<1x128xi1>, vector<1x128xf32>
    %c1_i32 = arith.constant 1 : i32
    %122 = vector.broadcast %c1_i32 : i32 to vector<1x128xi32>
    %123 = arith.cmpi eq, %115, %122 : vector<1x128xi32>
    %124 = vector.shape_cast %67 : vector<1x1xf32> to vector<1x1xf32>
    %125 = vector.broadcast %124 : vector<1x1xf32> to vector<1x128xf32>
    %126 = arith.select %123, %125, %121 : vector<1x128xi1>, vector<1x128xf32>
    %c2_i32 = arith.constant 2 : i32
    %127 = vector.broadcast %c2_i32 : i32 to vector<1x128xi32>
    %128 = arith.cmpi eq, %115, %127 : vector<1x128xi32>
    %129 = vector.shape_cast %113 : vector<1x1xf32> to vector<1x1xf32>
    %130 = vector.broadcast %129 : vector<1x1xf32> to vector<1x128xf32>
    %131 = arith.select %128, %130, %126 : vector<1x128xi1>, vector<1x128xf32>
    %c3_i32 = arith.constant 3 : i32
    %132 = vector.broadcast %c3_i32 : i32 to vector<1x128xi32>
    %133 = arith.cmpi eq, %115, %132 : vector<1x128xi32>
    %134 = vector.shape_cast %114 : vector<1x1xf32> to vector<1x1xf32>
    %135 = vector.broadcast %134 : vector<1x1xf32> to vector<1x128xf32>
    %136 = arith.select %133, %135, %131 : vector<1x128xi1>, vector<1x128xf32>
    %c0_35 = arith.constant 0 : index
    %c0_36 = arith.constant 0 : index
    %137 = vector.load %arg9[%c0_35, %c0_36] : memref<1x128xf32, #tpu.memory_space<vmem>>, vector<1x128xf32>
    tpu.vector_store %arg9[%c0_35, %c0_36], %136 {strides = array<i32>} : memref<1x128xf32, #tpu.memory_space<vmem>>, vector<1x128xf32>,
    return
  }
}

</mosaic_0001>

<llo_original>
// kernel: newtonian_vae_forward.1
$region0: #{newtonian_vae_forward.1}
  #allocation0 [shape = 'u32[]', space=smem, size = 0x4, offset = 0x4, fixed_abs, tag = 'smem constant byte address 0x4 - core index']
  #allocation1 [shape = 'u32[144,128]{1,0:T(1,128)}', space=vmem, size = 0x12000, scoped, tag = 'internal scratch']
  %s0 = inlined_call_operand.vmem [shape: f32[64,768], index: 0, kind: input, shape index: {}]
  %s1 = inlined_call_operand.vmem [shape: f32[64,4], index: 1, kind: input, shape index: {}]
  %s2 = inlined_call_operand.vmem [shape: f32[48,4], index: 2, kind: input, shape index: {}]
  %s3 = inlined_call_operand.vmem [shape: f32[48,2], index: 3, kind: input, shape index: {}]
  %s4 = inlined_call_operand.vmem [shape: bf16[768,32], index: 4, kind: input, shape index: {}]
  %s5 = inlined_call_operand.vmem [shape: f32[32,8], index: 5, kind: input, shape index: {}]
  %s6 = inlined_call_operand.vmem [shape: bf16[32,768], index: 6, kind: input, shape index: {}]
  %s7 = inlined_call_operand.vmem [shape: f32[1,768], index: 7, kind: input, shape index: {}]
  %s8 = inlined_call_operand.vmem [shape: f32[16,128], index: 8, kind: input, shape index: {}]
  %s9 = inlined_call_operand.vmem [shape: f32[1,128], index: 9, kind: output, shape index: {}]
  %s10 = sld [smem:[#allocation0]]
  $region46: #{newtonian_vae_forward.1} parent=0
    _
  %s12 = ssub.s32 1, %s10
  %s13 = scalar_select 0, %s12, %s10
  // Predicated region
  $region2: #{newtonian_vae_forward.1} parent=0 // pred_check
    _
  $region3: #{newtonian_vae_forward.1} parent=0 // pred_check_branch
    %15 = sbr.rel (0) target = $region5
  $region4: #{newtonian_vae_forward.1} parent=0 // pred_region
    _
  $region5: #{newtonian_vae_forward.1} parent=0 // pred_fallthru
    _
  // Predicated region
  $region6: #{newtonian_vae_forward.1} parent=0 // pred_check
    _
  $region7: #{newtonian_vae_forward.1} parent=0 // pred_check_branch
    %17 = sbr.rel (0) target = $region9
  $region8: #{newtonian_vae_forward.1} parent=0 // pred_region
    _
  $region9: #{newtonian_vae_forward.1} parent=0 // pred_fallthru
    _
  // Predicated region
  $region10: #{newtonian_vae_forward.1} parent=0 // pred_check
    _
  $region11: #{newtonian_vae_forward.1} parent=0 // pred_check_branch
    %19 = sbr.rel (0) target = $region13
  $region12: #{newtonian_vae_forward.1} parent=0 // pred_region
    _
  $region13: #{newtonian_vae_forward.1} parent=0 // pred_fallthru
    _
  // Predicated region
  $region14: #{newtonian_vae_forward.1} parent=0 // pred_check
    _
  $region15: #{newtonian_vae_forward.1} parent=0 // pred_check_branch
    %21 = sbr.rel (0) target = $region17
  $region16: #{newtonian_vae_forward.1} parent=0 // pred_region
    _
  $region17: #{newtonian_vae_forward.1} parent=0 // pred_fallthru
    _
  // Predicated region
  $region18: #{newtonian_vae_forward.1} parent=0 // pred_check
    _
  $region19: #{newtonian_vae_forward.1} parent=0 // pred_check_branch
    %23 = sbr.rel (0) target = $region21
  $region20: #{newtonian_vae_forward.1} parent=0 // pred_region
    _
  $region21: #{newtonian_vae_forward.1} parent=0 // pred_fallthru
    _
  // Predicated region
  $region22: #{newtonian_vae_forward.1} parent=0 // pred_check
    _
  $region23: #{newtonian_vae_forward.1} parent=0 // pred_check_branch
    %25 = sbr.rel (0) target = $region25
  $region24: #{newtonian_vae_forward.1} parent=0 // pred_region
    _
  $region25: #{newtonian_vae_forward.1} parent=0 // pred_fallthru
    _
  // Predicated region
  $region26: #{newtonian_vae_forward.1} parent=0 // pred_check
    _
  $region27: #{newtonian_vae_forward.1} parent=0 // pred_check_branch
    %27 = sbr.rel (0) target = $region29
  $region28: #{newtonian_vae_forward.1} parent=0 // pred_region
    _
  $region29: #{newtonian_vae_forward.1} parent=0 // pred_fallthru
    _
  // Predicated region
  $region30: #{newtonian_vae_forward.1} parent=0 // pred_check
    _
  $region31: #{newtonian_vae_forward.1} parent=0 // pred_check_branch
    %29 = sbr.rel (0) target = $region33
  $region32: #{newtonian_vae_forward.1} parent=0 // pred_region
    _
  $region33: #{newtonian_vae_forward.1} parent=0 // pred_fallthru
    _
  // Predicated region
  $region34: #{newtonian_vae_forward.1} parent=0 // pred_check
    _
  $region35: #{newtonian_vae_forward.1} parent=0 // pred_check_branch
    %31 = sbr.rel (0) target = $region37
  $region36: #{newtonian_vae_forward.1} parent=0 // pred_region
    _
  $region37: #{newtonian_vae_forward.1} parent=0 // pred_fallthru
    _
  %v33 = vld [vmem:[%s8] sm:$0xff]
  %v34 = vld [vmem:[%s8 + $0x8] sm:$0xff]
  %v35 = vld [vmem:[%s0] sm:$0xff]
  %v36 = vld [vmem:[%s0 + $0x8] sm:$0xff]
  %v37 = vld [vmem:[%s0 + $0x10] sm:$0xff]
  %v38 = vld [vmem:[%s0 + $0x18] sm:$0xff]
  %v39 = vld [vmem:[%s0 + $0x20] sm:$0xff]
  %v40 = vld [vmem:[%s0 + $0x28] sm:$0xff]
  %v41 = vld [vmem:[%s0 + $0x30] sm:$0xff]
  %v42 = vld [vmem:[%s0 + $0x38] sm:$0xff]
  %v43 = vld [vmem:[%s0 + $0x40] sm:$0xff]
  %v44 = vld [vmem:[%s0 + $0x48] sm:$0xff]
  %v45 = vld [vmem:[%s0 + $0x50] sm:$0xff]
  %v46 = vld [vmem:[%s0 + $0x58] sm:$0xff]
  %v47 = vld [vmem:[%s0 + $0x60] sm:$0xff]
  %v48 = vld [vmem:[%s0 + $0x68] sm:$0xff]
  %v49 = vld [vmem:[%s0 + $0x70] sm:$0xff]
  %v50 = vld [vmem:[%s0 + $0x78] sm:$0xff]
  %v51 = vld [vmem:[%s0 + $0x80] sm:$0xff]
  %v52 = vld [vmem:[%s0 + $0x88] sm:$0xff]
  %v53 = vld [vmem:[%s0 + $0x90] sm:$0xff]
  %v54 = vld [vmem:[%s0 + $0x98] sm:$0xff]
  %v55 = vld [vmem:[%s0 + $0xa0] sm:$0xff]
  %v56 = vld [vmem:[%s0 + $0xa8] sm:$0xff]
  %v57 = vld [vmem:[%s0 + $0xb0] sm:$0xff]
  %v58 = vld [vmem:[%s0 + $0xb8] sm:$0xff]
  %v59 = vld [vmem:[%s0 + $0xc0] sm:$0xff]
  %v60 = vld [vmem:[%s0 + $0xc8] sm:$0xff]
  %v61 = vld [vmem:[%s0 + $0xd0] sm:$0xff]
  %v62 = vld [vmem:[%s0 + $0xd8] sm:$0xff]
  %v63 = vld [vmem:[%s0 + $0xe0] sm:$0xff]
  %v64 = vld [vmem:[%s0 + $0xe8] sm:$0xff]
  %v65 = vld [vmem:[%s0 + $0xf0] sm:$0xff]
  %v66 = vld [vmem:[%s0 + $0xf8] sm:$0xff]
  %v67 = vld [vmem:[%s0 + $0x100] sm:$0xff]
  %v68 = vld [vmem:[%s0 + $0x108] sm:$0xff]
  %v69 = vld [vmem:[%s0 + $0x110] sm:$0xff]
  %v70 = vld [vmem:[%s0 + $0x118] sm:$0xff]
  %v71 = vld [vmem:[%s0 + $0x120] sm:$0xff]
  %v72 = vld [vmem:[%s0 + $0x128] sm:$0xff]
  %v73 = vld [vmem:[%s0 + $0x130] sm:$0xff]
  %v74 = vld [vmem:[%s0 + $0x138] sm:$0xff]
  %v75 = vld [vmem:[%s0 + $0x140] sm:$0xff]
  %v76 = vld [vmem:[%s0 + $0x148] sm:$0xff]
  %v77 = vld [vmem:[%s0 + $0x150] sm:$0xff]
  %v78 = vld [vmem:[%s0 + $0x158] sm:$0xff]
  %v79 = vld [vmem:[%s0 + $0x160] sm:$0xff]
  %v80 = vld [vmem:[%s0 + $0x168] sm:$0xff]
  %v81 = vld [vmem:[%s0 + $0x170] sm:$0xff]
  %v82 = vld [vmem:[%s0 + $0x178] sm:$0xff]
  %v83 = vpack.c.bf16 %v41, %v35
  %v84 = vpack.c.bf16 %v42, %v36
  %v85 = vpack.c.bf16 %v43, %v37
  %v86 = vpack.c.bf16 %v44, %v38
  %v87 = vpack.c.bf16 %v45, %v39
  %v88 = vpack.c.bf16 %v46, %v40
  %v89 = vpack.c.bf16 %v53, %v47
  %v90 = vpack.c.bf16 %v54, %v48
  %v91 = vpack.c.bf16 %v55, %v49
  %v92 = vpack.c.bf16 %v56, %v50
  %v93 = vpack.c.bf16 %v57, %v51
  %v94 = vpack.c.bf16 %v58, %v52
  %v95 = vpack.c.bf16 %v65, %v59
  %v96 = vpack.c.bf16 %v66, %v60
  %v97 = vpack.c.bf16 %v67, %v61
  %v98 = vpack.c.bf16 %v68, %v62
  %v99 = vpack.c.bf16 %v69, %v63
  %v100 = vpack.c.bf16 %v70, %v64
  %v101 = vpack.c.bf16 %v77, %v71
  %v102 = vpack.c.bf16 %v78, %v72
  %v103 = vpack.c.bf16 %v79, %v73
  %v104 = vpack.c.bf16 %v80, %v74
  %v105 = vpack.c.bf16 %v81, %v75
  %v106 = vpack.c.bf16 %v82, %v76
  %v107 = vld [vmem:[%s4] sm:$0xf]
  %v108 = vld [vmem:[%s4 + $0x4] sm:$0xf]
  %v109 = vld [vmem:[%s4 + $0x8] sm:$0xf]
  %v110 = vld [vmem:[%s4 + $0xc] sm:$0xf]
  %v111 = vld [vmem:[%s4 + $0x10] sm:$0xf]
  %v112 = vld [vmem:[%s4 + $0x14] sm:$0xf]
  %v113 = vld [vmem:[%s4 + $0x18] sm:$0xf]
  %v114 = vld [vmem:[%s4 + $0x1c] sm:$0xf]
  %v115 = vld [vmem:[%s4 + $0x20] sm:$0xf]
  %v116 = vld [vmem:[%s4 + $0x24] sm:$0xf]
  %v117 = vld [vmem:[%s4 + $0x28] sm:$0xf]
  %v118 = vld [vmem:[%s4 + $0x2c] sm:$0xf]
  %v119 = vld [vmem:[%s4 + $0x30] sm:$0xf]
  %v120 = vld [vmem:[%s4 + $0x34] sm:$0xf]
  %v121 = vld [vmem:[%s4 + $0x38] sm:$0xf]
  %v122 = vld [vmem:[%s4 + $0x3c] sm:$0xf]
  %v123 = vld [vmem:[%s4 + $0x40] sm:$0xf]
  %v124 = vld [vmem:[%s4 + $0x44] sm:$0xf]
  %v125 = vld [vmem:[%s4 + $0x48] sm:$0xf]
  %v126 = vld [vmem:[%s4 + $0x4c] sm:$0xf]
  %v127 = vld [vmem:[%s4 + $0x50] sm:$0xf]
  %v128 = vld [vmem:[%s4 + $0x54] sm:$0xf]
  %v129 = vld [vmem:[%s4 + $0x58] sm:$0xf]
  %v130 = vld [vmem:[%s4 + $0x5c] sm:$0xf]
  %v131 = vld [vmem:[%s4 + $0x60] sm:$0xf]
  %v132 = vld [vmem:[%s4 + $0x64] sm:$0xf]
  %v133 = vld [vmem:[%s4 + $0x68] sm:$0xf]
  %v134 = vld [vmem:[%s4 + $0x6c] sm:$0xf]
  %v135 = vld [vmem:[%s4 + $0x70] sm:$0xf]
  %v136 = vld [vmem:[%s4 + $0x74] sm:$0xf]
  %v137 = vld [vmem:[%s4 + $0x78] sm:$0xf]
  %v138 = vld [vmem:[%s4 + $0x7c] sm:$0xf]
  %v139 = vld [vmem:[%s4 + $0x80] sm:$0xf]
  %v140 = vld [vmem:[%s4 + $0x84] sm:$0xf]
  %v141 = vld [vmem:[%s4 + $0x88] sm:$0xf]
  %v142 = vld [vmem:[%s4 + $0x8c] sm:$0xf]
  %v143 = vld [vmem:[%s4 + $0x90] sm:$0xf]
  %v144 = vld [vmem:[%s4 + $0x94] sm:$0xf]
  %v145 = vld [vmem:[%s4 + $0x98] sm:$0xf]
  %v146 = vld [vmem:[%s4 + $0x9c] sm:$0xf]
  %v147 = vld [vmem:[%s4 + $0xa0] sm:$0xf]
  %v148 = vld [vmem:[%s4 + $0xa4] sm:$0xf]
  %v149 = vld [vmem:[%s4 + $0xa8] sm:$0xf]
  %v150 = vld [vmem:[%s4 + $0xac] sm:$0xf]
  %v151 = vld [vmem:[%s4 + $0xb0] sm:$0xf]
  %v152 = vld [vmem:[%s4 + $0xb4] sm:$0xf]
  %v153 = vld [vmem:[%s4 + $0xb8] sm:$0xf]
  %v154 = vld [vmem:[%s4 + $0xbc] sm:$0xf]
  %v155 = vld [vmem:[%s4 + $0xc0] sm:$0xf]
  %v156 = vld [vmem:[%s4 + $0xc4] sm:$0xf]
  %v157 = vld [vmem:[%s4 + $0xc8] sm:$0xf]
  %v158 = vld [vmem:[%s4 + $0xcc] sm:$0xf]
  %v159 = vld [vmem:[%s4 + $0xd0] sm:$0xf]
  %v160 = vld [vmem:[%s4 + $0xd4] sm:$0xf]
  %v161 = vld [vmem:[%s4 + $0xd8] sm:$0xf]
  %v162 = vld [vmem:[%s4 + $0xdc] sm:$0xf]
  %v163 = vld [vmem:[%s4 + $0xe0] sm:$0xf]
  %v164 = vld [vmem:[%s4 + $0xe4] sm:$0xf]
  %v165 = vld [vmem:[%s4 + $0xe8] sm:$0xf]
  %v166 = vld [vmem:[%s4 + $0xec] sm:$0xf]
  %v167 = vld [vmem:[%s4 + $0xf0] sm:$0xf]
  %v168 = vld [vmem:[%s4 + $0xf4] sm:$0xf]
  %v169 = vld [vmem:[%s4 + $0xf8] sm:$0xf]
  %v170 = vld [vmem:[%s4 + $0xfc] sm:$0xf]
  %v171 = vld [vmem:[%s4 + $0x100] sm:$0xf]
  %v172 = vld [vmem:[%s4 + $0x104] sm:$0xf]
  %v173 = vld [vmem:[%s4 + $0x108] sm:$0xf]
  %v174 = vld [vmem:[%s4 + $0x10c] sm:$0xf]
  %v175 = vld [vmem:[%s4 + $0x110] sm:$0xf]
  %v176 = vld [vmem:[%s4 + $0x114] sm:$0xf]
  %v177 = vld [vmem:[%s4 + $0x118] sm:$0xf]
  %v178 = vld [vmem:[%s4 + $0x11c] sm:$0xf]
  %v179 = vld [vmem:[%s4 + $0x120] sm:$0xf]
  %v180 = vld [vmem:[%s4 + $0x124] sm:$0xf]
  %v181 = vld [vmem:[%s4 + $0x128] sm:$0xf]
  %v182 = vld [vmem:[%s4 + $0x12c] sm:$0xf]
  %v183 = vld [vmem:[%s4 + $0x130] sm:$0xf]
  %v184 = vld [vmem:[%s4 + $0x134] sm:$0xf]
  %v185 = vld [vmem:[%s4 + $0x138] sm:$0xf]
  %v186 = vld [vmem:[%s4 + $0x13c] sm:$0xf]
  %v187 = vld [vmem:[%s4 + $0x140] sm:$0xf]
  %v188 = vld [vmem:[%s4 + $0x144] sm:$0xf]
  %v189 = vld [vmem:[%s4 + $0x148] sm:$0xf]
  %v190 = vld [vmem:[%s4 + $0x14c] sm:$0xf]
  %v191 = vld [vmem:[%s4 + $0x150] sm:$0xf]
  %v192 = vld [vmem:[%s4 + $0x154] sm:$0xf]
  %v193 = vld [vmem:[%s4 + $0x158] sm:$0xf]
  %v194 = vld [vmem:[%s4 + $0x15c] sm:$0xf]
  %v195 = vld [vmem:[%s4 + $0x160] sm:$0xf]
  %v196 = vld [vmem:[%s4 + $0x164] sm:$0xf]
  %v197 = vld [vmem:[%s4 + $0x168] sm:$0xf]
  %v198 = vld [vmem:[%s4 + $0x16c] sm:$0xf]
  %v199 = vld [vmem:[%s4 + $0x170] sm:$0xf]
  %v200 = vld [vmem:[%s4 + $0x174] sm:$0xf]
  %v201 = vld [vmem:[%s4 + $0x178] sm:$0xf]
  %v202 = vld [vmem:[%s4 + $0x17c] sm:$0xf]
  %v203 = vlaneseq
  %v204 = vshrl.u32 %v203, 7
  %v205 = vsub.s32 0, %v204
  %v206 = vrot.slane %v33, %v205
  %v303 = vunpack.c.l.b16 %v107
  %v304 = vunpack.c.l.b16 %v108
  %v305 = vunpack.c.l.b16 %v109
  %v306 = vunpack.c.l.b16 %v110
  %v307 = vunpack.c.l.b16 %v111
  %v308 = vunpack.c.l.b16 %v112
  %v309 = vunpack.c.l.b16 %v113
  %v310 = vunpack.c.l.b16 %v114
  %v311 = vunpack.c.l.b16 %v115
  %v312 = vunpack.c.l.b16 %v116
  %v313 = vunpack.c.l.b16 %v117
  %v314 = vunpack.c.l.b16 %v118
  %v315 = vunpack.c.l.b16 %v119
  %v316 = vunpack.c.l.b16 %v120
  %v317 = vunpack.c.l.b16 %v121
  %v318 = vunpack.c.l.b16 %v122
  %v319 = vunpack.c.l.b16 %v123
  %v320 = vunpack.c.l.b16 %v124
  %v321 = vunpack.c.l.b16 %v125
  %v322 = vunpack.c.l.b16 %v126
  %v323 = vunpack.c.l.b16 %v127
  %v324 = vunpack.c.l.b16 %v128
  %v325 = vunpack.c.l.b16 %v129
  %v326 = vunpack.c.l.b16 %v130
  %v327 = vunpack.c.l.b16 %v131
  %v328 = vunpack.c.l.b16 %v132
  %v329 = vunpack.c.l.b16 %v133
  %v330 = vunpack.c.l.b16 %v134
  %v331 = vunpack.c.l.b16 %v135
  %v332 = vunpack.c.l.b16 %v136
  %v333 = vunpack.c.l.b16 %v137
  %v334 = vunpack.c.l.b16 %v138
  %v335 = vunpack.c.l.b16 %v139
  %v336 = vunpack.c.l.b16 %v140
  %v337 = vunpack.c.l.b16 %v141
  %v338 = vunpack.c.l.b16 %v142
  %v339 = vunpack.c.l.b16 %v143
  %v340 = vunpack.c.l.b16 %v144
  %v341 = vunpack.c.l.b16 %v145
  %v342 = vunpack.c.l.b16 %v146
  %v343 = vunpack.c.l.b16 %v147
  %v344 = vunpack.c.l.b16 %v148
  %v345 = vunpack.c.l.b16 %v149
  %v346 = vunpack.c.l.b16 %v150
  %v347 = vunpack.c.l.b16 %v151
  %v348 = vunpack.c.l.b16 %v152
  %v349 = vunpack.c.l.b16 %v153
  %v350 = vunpack.c.l.b16 %v154
  %v351 = vunpack.c.l.b16 %v155
  %v352 = vunpack.c.l.b16 %v156
  %v353 = vunpack.c.l.b16 %v157
  %v354 = vunpack.c.l.b16 %v158
  %v355 = vunpack.c.l.b16 %v159
  %v356 = vunpack.c.l.b16 %v160
  %v357 = vunpack.c.l.b16 %v161
  %v358 = vunpack.c.l.b16 %v162
  %v359 = vunpack.c.l.b16 %v163
  %v360 = vunpack.c.l.b16 %v164
  %v361 = vunpack.c.l.b16 %v165
  %v362 = vunpack.c.l.b16 %v166
  %v363 = vunpack.c.l.b16 %v167
  %v364 = vunpack.c.l.b16 %v168
  %v365 = vunpack.c.l.b16 %v169
  %v366 = vunpack.c.l.b16 %v170
  %v367 = vunpack.c.l.b16 %v171
  %v368 = vunpack.c.l.b16 %v172
  %v369 = vunpack.c.l.b16 %v173
  %v370 = vunpack.c.l.b16 %v174
  %v371 = vunpack.c.l.b16 %v175
  %v372 = vunpack.c.l.b16 %v176
  %v373 = vunpack.c.l.b16 %v177
  %v374 = vunpack.c.l.b16 %v178
  %v375 = vunpack.c.l.b16 %v179
  %v376 = vunpack.c.l.b16 %v180
  %v377 = vunpack.c.l.b16 %v181
  %v378 = vunpack.c.l.b16 %v182
  %v379 = vunpack.c.l.b16 %v183
  %v380 = vunpack.c.l.b16 %v184
  %v381 = vunpack.c.l.b16 %v185
  %v382 = vunpack.c.l.b16 %v186
  %v383 = vunpack.c.l.b16 %v187
  %v384 = vunpack.c.l.b16 %v188
  %v385 = vunpack.c.l.b16 %v189
  %v386 = vunpack.c.l.b16 %v190
  %v387 = vunpack.c.l.b16 %v191
  %v388 = vunpack.c.l.b16 %v192
  %v389 = vunpack.c.l.b16 %v193
  %v390 = vunpack.c.l.b16 %v194
  %v391 = vunpack.c.l.b16 %v195
  %v392 = vunpack.c.l.b16 %v196
  %v393 = vunpack.c.l.b16 %v197
  %v394 = vunpack.c.l.b16 %v198
  %v395 = vunpack.c.l.b16 %v199
  %v396 = vunpack.c.l.b16 %v200
  %v397 = vunpack.c.l.b16 %v201
  %v398 = vunpack.c.l.b16 %v202
  %v399 = vpack.c.b16 %v304, %v303
  %v400 = vpack.c.b16 %v306, %v305
  %v401 = vpack.c.b16 %v308, %v307
  %v402 = vpack.c.b16 %v310, %v309
  %v403 = vpack.c.b16 %v312, %v311
  %v404 = vpack.c.b16 %v314, %v313
  %v405 = vpack.c.b16 %v316, %v315
  %v406 = vpack.c.b16 %v318, %v317
  %v407 = vpack.c.b16 %v320, %v319
  %v408 = vpack.c.b16 %v322, %v321
  %v409 = vpack.c.b16 %v324, %v323
  %v410 = vpack.c.b16 %v326, %v325
  %v411 = vpack.c.b16 %v328, %v327
  %v412 = vpack.c.b16 %v330, %v329
  %v413 = vpack.c.b16 %v332, %v331
  %v414 = vpack.c.b16 %v334, %v333
  %v415 = vpack.c.b16 %v336, %v335
  %v416 = vpack.c.b16 %v338, %v337
  %v417 = vpack.c.b16 %v340, %v339
  %v418 = vpack.c.b16 %v342, %v341
  %v419 = vpack.c.b16 %v344, %v343
  %v420 = vpack.c.b16 %v346, %v345
  %v421 = vpack.c.b16 %v348, %v347
  %v422 = vpack.c.b16 %v350, %v349
  %v423 = vpack.c.b16 %v352, %v351
  %v424 = vpack.c.b16 %v354, %v353
  %v425 = vpack.c.b16 %v356, %v355
  %v426 = vpack.c.b16 %v358, %v357
  %v427 = vpack.c.b16 %v360, %v359
  %v428 = vpack.c.b16 %v362, %v361
  %v429 = vpack.c.b16 %v364, %v363
  %v430 = vpack.c.b16 %v366, %v365
  %v431 = vpack.c.b16 %v368, %v367
  %v432 = vpack.c.b16 %v370, %v369
  %v433 = vpack.c.b16 %v372, %v371
  %v434 = vpack.c.b16 %v374, %v373
  %v435 = vpack.c.b16 %v376, %v375
  %v436 = vpack.c.b16 %v378, %v377
  %v437 = vpack.c.b16 %v380, %v379
  %v438 = vpack.c.b16 %v382, %v381
  %v439 = vpack.c.b16 %v384, %v383
  %v440 = vpack.c.b16 %v386, %v385
  %v441 = vpack.c.b16 %v388, %v387
  %v442 = vpack.c.b16 %v390, %v389
  %v443 = vpack.c.b16 %v392, %v391
  %v444 = vpack.c.b16 %v394, %v393
  %v445 = vpack.c.b16 %v396, %v395
  %v446 = vpack.c.b16 %v398, %v397
  %495 = vmatprep.subr.bf16.mxu0 0
  %496 = vmatpush1.bf16.msra.mxu0 %v399
  %497 = vmatprep.subr.bf16.mxu0 0
  %498 = vmatpush1.bf16.msra.mxu0 %v400
  %499 = vmatprep.subr.bf16.mxu0 0
  %500 = vmatpush1.bf16.msra.mxu0 %v401
  %501 = vmatprep.subr.bf16.mxu0 0
  %502 = vmatpush1.bf16.msra.mxu0 %v402
  %503 = vmatprep.subr.bf16.mxu0 0
  %504 = vmatpush1.bf16.msra.mxu0 %v403
  %505 = vmatprep.subr.bf16.mxu0 0
  %506 = vmatpush1.bf16.msra.mxu0 %v404
  %507 = vmatprep.subr.bf16.mxu0 0
  %508 = vmatpush1.bf16.msra.mxu0 %v405
  %509 = vmatprep.subr.bf16.mxu0 0
  %510 = vmatpush1.bf16.msra.mxu0 %v406
  %511 = vmatprep.subr.bf16.mxu0 0
  %512 = vmatpush1.bf16.msra.mxu0 %v407
  %513 = vmatprep.subr.bf16.mxu0 0
  %514 = vmatpush1.bf16.msra.mxu0 %v408
  %515 = vmatprep.subr.bf16.mxu0 0
  %516 = vmatpush1.bf16.msra.mxu0 %v409
  %517 = vmatprep.subr.bf16.mxu0 0
  %518 = vmatpush1.bf16.msra.mxu0 %v410
  %519 = vmatprep.subr.bf16.mxu0 0
  %520 = vmatpush1.bf16.msra.mxu0 %v411
  %521 = vmatprep.subr.bf16.mxu0 0
  %522 = vmatpush1.bf16.msra.mxu0 %v412
  %523 = vmatprep.subr.bf16.mxu0 0
  %524 = vmatpush1.bf16.msra.mxu0 %v413
  %525 = vmatprep.subr.bf16.mxu0 0
  %526 = vmatpush1.bf16.msra.mxu0 %v414
  %527 = vmatprep.mubr.bf16.mxu0 %v84
  %528 = vmatmul.mubr.bf16.gmra.mrb[0].mxu0 %v83
  %v529 = vpop.f32.mrb[0].mxu0
  %v530 = vadd.f32 %v206, %v529
  %v531 = vpop.f32.mrb[0].mxu0
  %v532 = vpop.f32.mrb[0].mxu0
  %v533 = vadd.f32 %v206, %v532
  %v534 = vpop.f32.mrb[0].mxu0
  %535 = vmatprep.mubr.bf16.mxu0 %v90
  %536 = vmatmul.mubr.bf16.gmra.mrb[0].mxu0 %v89
  %v537 = vpop.f32.mrb[0].mxu0
  %v538 = vadd.f32 %v206, %v537
  %v539 = vpop.f32.mrb[0].mxu0
  %v540 = vpop.f32.mrb[0].mxu0
  %v541 = vadd.f32 %v206, %v540
  %v542 = vpop.f32.mrb[0].mxu0
  %543 = vmatprep.mubr.bf16.mxu0 %v96
  %544 = vmatmul.mubr.bf16.gmra.mrb[0].mxu0 %v95
  %v545 = vpop.f32.mrb[0].mxu0
  %v546 = vadd.f32 %v206, %v545
  %v547 = vpop.f32.mrb[0].mxu0
  %v548 = vpop.f32.mrb[0].mxu0
  %v549 = vadd.f32 %v206, %v548
  %v550 = vpop.f32.mrb[0].mxu0
  %551 = vmatprep.mubr.bf16.mxu0 %v102
  %552 = vmatmul.mubr.bf16.gmra.mrb[0].mxu0 %v101
  %v553 = vpop.f32.mrb[0].mxu0
  %v554 = vadd.f32 %v206, %v553
  %v555 = vpop.f32.mrb[0].mxu0
  %v556 = vpop.f32.mrb[0].mxu0
  %v557 = vadd.f32 %v206, %v556
  %v558 = vpop.f32.mrb[0].mxu0
  %559 = vdwg.mxu0
  %560 = vmatprep.subr.bf16.mxu0 0
  %561 = vmatpush1.bf16.msra.mxu0 %v415
  %562 = vmatprep.subr.bf16.mxu0 0
  %563 = vmatpush1.bf16.msra.mxu0 %v416
  %564 = vmatprep.subr.bf16.mxu0 0
  %565 = vmatpush1.bf16.msra.mxu0 %v417
  %566 = vmatprep.subr.bf16.mxu0 0
  %567 = vmatpush1.bf16.msra.mxu0 %v418
  %568 = vmatprep.subr.bf16.mxu0 0
  %569 = vmatpush1.bf16.msra.mxu0 %v419
  %570 = vmatprep.subr.bf16.mxu0 0
  %571 = vmatpush1.bf16.msra.mxu0 %v420
  %572 = vmatprep.subr.bf16.mxu0 0
  %573 = vmatpush1.bf16.msra.mxu0 %v421
  %574 = vmatprep.subr.bf16.mxu0 0
  %575 = vmatpush1.bf16.msra.mxu0 %v422
  %576 = vmatprep.subr.bf16.mxu0 0
  %577 = vmatpush1.bf16.msra.mxu0 %v423
  %578 = vmatprep.subr.bf16.mxu0 0
  %579 = vmatpush1.bf16.msra.mxu0 %v424
  %580 = vmatprep.subr.bf16.mxu0 0
  %581 = vmatpush1.bf16.msra.mxu0 %v425
  %582 = vmatprep.subr.bf16.mxu0 0
  %583 = vmatpush1.bf16.msra.mxu0 %v426
  %584 = vmatprep.subr.bf16.mxu0 0
  %585 = vmatpush1.bf16.msra.mxu0 %v427
  %586 = vmatprep.subr.bf16.mxu0 0
  %587 = vmatpush1.bf16.msra.mxu0 %v428
  %588 = vmatprep.subr.bf16.mxu0 0
  %589 = vmatpush1.bf16.msra.mxu0 %v429
  %590 = vmatprep.subr.bf16.mxu0 0
  %591 = vmatpush1.bf16.msra.mxu0 %v430
  %592 = vmatprep.mubr.bf16.mxu0 %v86
  %593 = vmatmul.mubr.bf16.gmra.mrb[0].mxu0 %v85
  %v594 = vpop.f32.mrb[0].mxu0
  %v595 = vadd.f32 %v530, %v594
  %v596 = vpop.f32.mrb[0].mxu0
  %v597 = vpop.f32.mrb[0].mxu0
  %v598 = vadd.f32 %v533, %v597
  %v599 = vpop.f32.mrb[0].mxu0
  %600 = vmatprep.mubr.bf16.mxu0 %v92
  %601 = vmatmul.mubr.bf16.gmra.mrb[0].mxu0 %v91
  %v602 = vpop.f32.mrb[0].mxu0
  %v603 = vadd.f32 %v538, %v602
  %v604 = vpop.f32.mrb[0].mxu0
  %v605 = vpop.f32.mrb[0].mxu0
  %v606 = vadd.f32 %v541, %v605
  %v607 = vpop.f32.mrb[0].mxu0
  %608 = vmatprep.mubr.bf16.mxu0 %v98
  %609 = vmatmul.mubr.bf16.gmra.mrb[0].mxu0 %v97
  %v610 = vpop.f32.mrb[0].mxu0
  %v611 = vadd.f32 %v546, %v610
  %v612 = vpop.f32.mrb[0].mxu0
  %v613 = vpop.f32.mrb[0].mxu0
  %v614 = vadd.f32 %v549, %v613
  %v615 = vpop.f32.mrb[0].mxu0
  %616 = vmatprep.mubr.bf16.mxu0 %v104
  %617 = vmatmul.mubr.bf16.gmra.mrb[0].mxu0 %v103
  %v618 = vpop.f32.mrb[0].mxu0
  %v619 = vadd.f32 %v554, %v618
  %v620 = vpop.f32.mrb[0].mxu0
  %v621 = vpop.f32.mrb[0].mxu0
  %v622 = vadd.f32 %v557, %v621
  %v623 = vpop.f32.mrb[0].mxu0
  %624 = vdwg.mxu0
  %625 = vmatprep.subr.bf16.mxu0 0
  %626 = vmatpush1.bf16.msra.mxu0 %v431
  %627 = vmatprep.subr.bf16.mxu0 0
  %628 = vmatpush1.bf16.msra.mxu0 %v432
  %629 = vmatprep.subr.bf16.mxu0 0
  %630 = vmatpush1.bf16.msra.mxu0 %v433
  %631 = vmatprep.subr.bf16.mxu0 0
  %632 = vmatpush1.bf16.msra.mxu0 %v434
  %633 = vmatprep.subr.bf16.mxu0 0
  %634 = vmatpush1.bf16.msra.mxu0 %v435
  %635 = vmatprep.subr.bf16.mxu0 0
  %636 = vmatpush1.bf16.msra.mxu0 %v436
  %637 = vmatprep.subr.bf16.mxu0 0
  %638 = vmatpush1.bf16.msra.mxu0 %v437
  %639 = vmatprep.subr.bf16.mxu0 0
  %640 = vmatpush1.bf16.msra.mxu0 %v438
  %641 = vmatprep.subr.bf16.mxu0 0
  %642 = vmatpush1.bf16.msra.mxu0 %v439
  %643 = vmatprep.subr.bf16.mxu0 0
  %644 = vmatpush1.bf16.msra.mxu0 %v440
  %645 = vmatprep.subr.bf16.mxu0 0
  %646 = vmatpush1.bf16.msra.mxu0 %v441
  %647 = vmatprep.subr.bf16.mxu0 0
  %648 = vmatpush1.bf16.msra.mxu0 %v442
  %649 = vmatprep.subr.bf16.mxu0 0
  %650 = vmatpush1.bf16.msra.mxu0 %v443
  %651 = vmatprep.subr.bf16.mxu0 0
  %652 = vmatpush1.bf16.msra.mxu0 %v444
  %653 = vmatprep.subr.bf16.mxu0 0
  %654 = vmatpush1.bf16.msra.mxu0 %v445
  %655 = vmatprep.subr.bf16.mxu0 0
  %656 = vmatpush1.bf16.msra.mxu0 %v446
  %657 = vmatprep.mubr.bf16.mxu0 %v88
  %658 = vmatmul.mubr.bf16.gmra.mrb[0].mxu0 %v87
  %v659 = vpop.f32.mrb[0].mxu0
  %v660 = vadd.f32 %v595, %v659
  %v661 = vpop.f32.mrb[0].mxu0
  %v662 = vpop.f32.mrb[0].mxu0
  %v663 = vadd.f32 %v598, %v662
  %v664 = vpop.f32.mrb[0].mxu0
  %665 = vmatprep.mubr.bf16.mxu0 %v94
  %666 = vmatmul.mubr.bf16.gmra.mrb[0].mxu0 %v93
  %v667 = vpop.f32.mrb[0].mxu0
  %v668 = vadd.f32 %v603, %v667
  %v669 = vpop.f32.mrb[0].mxu0
  %v670 = vpop.f32.mrb[0].mxu0
  %v671 = vadd.f32 %v606, %v670
  %v672 = vpop.f32.mrb[0].mxu0
  %673 = vmatprep.mubr.bf16.mxu0 %v100
  %674 = vmatmul.mubr.bf16.gmra.mrb[0].mxu0 %v99
  %v675 = vpop.f32.mrb[0].mxu0
  %v676 = vadd.f32 %v611, %v675
  %v677 = vpop.f32.mrb[0].mxu0
  %v678 = vpop.f32.mrb[0].mxu0
  %v679 = vadd.f32 %v614, %v678
  %v680 = vpop.f32.mrb[0].mxu0
  %681 = vmatprep.mubr.bf16.mxu0 %v106
  %682 = vmatmul.mubr.bf16.gmra.mrb[0].mxu0 %v105
  %v683 = vpop.f32.mrb[0].mxu0
  %v684 = vadd.f32 %v619, %v683
  %v685 = vpop.f32.mrb[0].mxu0
  %v686 = vpop.f32.mrb[0].mxu0
  %v687 = vadd.f32 %v622, %v686
  %v688 = vpop.f32.mrb[0].mxu0
  %689 = vdwg.mxu0
  %v690 = vmax.f32 %v660, 0.0
  %v691 = vmax.f32 %v663, 0.0
  %v692 = vmax.f32 %v668, 0.0
  %v693 = vmax.f32 %v671, 0.0
  %v694 = vmax.f32 %v676, 0.0
  %v695 = vmax.f32 %v679, 0.0
  %v696 = vmax.f32 %v684, 0.0
  %v697 = vmax.f32 %v687, 0.0
  %v698 = vld [vmem:[%s5] sm:$0xff]
  %v699 = vld [vmem:[%s5 + $0x8] sm:$0xff]
  %v700 = vld [vmem:[%s5 + $0x10] sm:$0xff]
  %v701 = vld [vmem:[%s5 + $0x18] sm:$0xff]
  %v702 = vlaneseq
  %v703 = vshrl.u32 %v702, 7
  %v704 = vsub.s32 1, %v703
  %v705 = vrot.slane %v33, %v704
  %vm706 = vcmask 261120
  %v708 = vsel %vm706, %v690, 0
  %v711 = vsel %vm706, %v691, 0
  %v714 = vsel %vm706, %v692, 0
  %v717 = vsel %vm706, %v693, 0
  %v720 = vsel %vm706, %v694, 0
  %v723 = vsel %vm706, %v695, 0
  %v726 = vsel %vm706, %v696, 0
  %v729 = vsel %vm706, %v697, 0
  %731 = vmatprep.subr.mxu0 0.0
  %732 = vmatpush1.msra.mxu0 %v698
  %733 = vmatprep.subr.mxu0 0.0
  %734 = vmatpush1.msra.mxu0 %v699
  %735 = vmatprep.subr.mxu0 0.0
  %736 = vmatpush1.msra.mxu0 %v700
  %737 = vmatprep.subr.mxu0 0.0
  %738 = vmatpush1.msra.mxu0 %v701
  %739 = vmatprep.subr.mxu0 0.0
  %740 = vmatpush1.msra.mxu0 0.0
  %741 = vmatprep.subr.mxu0 0.0
  %742 = vmatpush1.msra.mxu0 0.0
  %743 = vmatprep.subr.mxu0 0.0
  %744 = vmatpush1.msra.mxu0 0.0
  %745 = vmatprep.subr.mxu0 0.0
  %746 = vmatpush1.msra.mxu0 0.0
  %747 = vmatprep.subr.mxu0 0.0
  %748 = vmatpush1.msra.mxu0 0.0
  %749 = vmatprep.subr.mxu0 0.0
  %750 = vmatpush1.msra.mxu0 0.0
  %751 = vmatprep.subr.mxu0 0.0
  %752 = vmatpush1.msra.mxu0 0.0
  %753 = vmatprep.subr.mxu0 0.0
  %754 = vmatpush1.msra.mxu0 0.0
  %755 = vmatprep.subr.mxu0 0.0
  %756 = vmatpush1.msra.mxu0 0.0
  %757 = vmatprep.subr.mxu0 0.0
  %758 = vmatpush1.msra.mxu0 0.0
  %759 = vmatprep.subr.mxu0 0.0
  %760 = vmatpush1.msra.mxu0 0.0
  %761 = vmatprep.subr.mxu0 0.0
  %762 = vmatpush1.msra.mxu0 0.0
  %763 = vmatprep.subr.mxu0 0.0
  %764 = vmatpush1.msra.mxu0 0.0
  %765 = vmatprep.subr.mxu0 0.0
  %766 = vmatpush1.msra.mxu0 0.0
  %767 = vmatprep.subr.mxu0 0.0
  %768 = vmatpush1.msra.mxu0 0.0
  %769 = vmatprep.subr.mxu0 0.0
  %770 = vmatpush1.msra.mxu0 0.0
  %771 = vmatprep.subr.mxu0 0.0
  %772 = vmatpush1.msra.mxu0 0.0
  %773 = vmatprep.subr.mxu0 0.0
  %774 = vmatpush1.msra.mxu0 0.0
  %775 = vmatprep.subr.mxu0 0.0
  %776 = vmatpush1.msra.mxu0 0.0
  %777 = vmatprep.subr.mxu0 0.0
  %778 = vmatpush1.msra.mxu0 0.0
  %779 = vmatprep.subr.mxu0 0.0
  %780 = vmatpush1.msra.mxu0 0.0
  %781 = vmatprep.subr.mxu0 0.0
  %782 = vmatpush1.msra.mxu0 0.0
  %783 = vmatprep.subr.mxu0 0.0
  %784 = vmatpush1.msra.mxu0 0.0
  %785 = vmatprep.subr.mxu0 0.0
  %786 = vmatpush1.msra.mxu0 0.0
  %787 = vmatprep.subr.mxu0 0.0
  %788 = vmatpush1.msra.mxu0 0.0
  %789 = vmatprep.subr.mxu0 0.0
  %790 = vmatpush1.msra.mxu0 0.0
  %791 = vmatprep.subr.mxu0 0.0
  %792 = vmatpush1.msra.mxu0 0.0
  %793 = vmatprep.subr.mxu0 0.0
  %794 = vmatpush1.msra.mxu0 0.0
  %795 = vmatprep.mubr.f32.mxu0 0.0
  %796 = vmatmul.mubr.f32.gmra.mrb[0].mxu0 %v708
  %v797 = vpop.f32.mrb[0].mxu0
  %v798 = vadd.f32 %v705, %v797
  %v799 = vpop.f32.mrb[0].mxu0
  %800 = vmatprep.mubr.f32.mxu0 0.0
  %801 = vmatmul.mubr.f32.gmra.mrb[0].mxu0 %v711
  %v802 = vpop.f32.mrb[0].mxu0
  %v803 = vadd.f32 %v705, %v802
  %v804 = vpop.f32.mrb[0].mxu0
  %805 = vmatprep.mubr.f32.mxu0 0.0
  %806 = vmatmul.mubr.f32.gmra.mrb[0].mxu0 %v714
  %v807 = vpop.f32.mrb[0].mxu0
  %v808 = vadd.f32 %v705, %v807
  %v809 = vpop.f32.mrb[0].mxu0
  %810 = vmatprep.mubr.f32.mxu0 0.0
  %811 = vmatmul.mubr.f32.gmra.mrb[0].mxu0 %v717
  %v812 = vpop.f32.mrb[0].mxu0
  %v813 = vadd.f32 %v705, %v812
  %v814 = vpop.f32.mrb[0].mxu0
  %815 = vmatprep.mubr.f32.mxu0 0.0
  %816 = vmatmul.mubr.f32.gmra.mrb[0].mxu0 %v720
  %v817 = vpop.f32.mrb[0].mxu0
  %v818 = vadd.f32 %v705, %v817
  %v819 = vpop.f32.mrb[0].mxu0
  %820 = vmatprep.mubr.f32.mxu0 0.0
  %821 = vmatmul.mubr.f32.gmra.mrb[0].mxu0 %v723
  %v822 = vpop.f32.mrb[0].mxu0
  %v823 = vadd.f32 %v705, %v822
  %v824 = vpop.f32.mrb[0].mxu0
  %825 = vmatprep.mubr.f32.mxu0 0.0
  %826 = vmatmul.mubr.f32.gmra.mrb[0].mxu0 %v726
  %v827 = vpop.f32.mrb[0].mxu0
  %v828 = vadd.f32 %v705, %v827
  %v829 = vpop.f32.mrb[0].mxu0
  %830 = vmatprep.mubr.f32.mxu0 0.0
  %831 = vmatmul.mubr.f32.gmra.mrb[0].mxu0 %v729
  %v832 = vpop.f32.mrb[0].mxu0
  %v833 = vadd.f32 %v705, %v832
  %v834 = vpop.f32.mrb[0].mxu0
  %835 = vdwg.mxu0
  %v836 = vmul.f32 %v798, 1.442695
  %v837 = vpow.pop %v836
  %v838 = vmul.f32 %v803, 1.442695
  %v839 = vpow.pop %v838
  %v840 = vmul.f32 %v808, 1.442695
  %v841 = vpow.pop %v840
  %v842 = vmul.f32 %v813, 1.442695
  %v843 = vpow.pop %v842
  %v844 = vmul.f32 %v818, 1.442695
  %v845 = vpow.pop %v844
  %v846 = vmul.f32 %v823, 1.442695
  %v847 = vpow.pop %v846
  %v848 = vmul.f32 %v828, 1.442695
  %v849 = vpow.pop %v848
  %v850 = vmul.f32 %v833, 1.442695
  %v851 = vpow.pop %v850
  %v852 = vld [vmem:[%s1] sm:$0xff]
  %v853 = vld [vmem:[%s1 + $0x8] sm:$0xff]
  %v854 = vld [vmem:[%s1 + $0x10] sm:$0xff]
  %v855 = vld [vmem:[%s1 + $0x18] sm:$0xff]
  %v856 = vld [vmem:[%s1 + $0x20] sm:$0xff]
  %v857 = vld [vmem:[%s1 + $0x28] sm:$0xff]
  %v858 = vld [vmem:[%s1 + $0x30] sm:$0xff]
  %v859 = vld [vmem:[%s1 + $0x38] sm:$0xff]
  %868 = vrot.lane.b32.xlu0 %v852, 4
  %v869 = vpop.permute.xlu0 %868
  %870 = vrot.lane.b32.xlu0 %v853, 4
  %v871 = vpop.permute.xlu0 %870
  %872 = vrot.lane.b32.xlu0 %v854, 4
  %v873 = vpop.permute.xlu0 %872
  %874 = vrot.lane.b32.xlu0 %v855, 4
  %v875 = vpop.permute.xlu0 %874
  %876 = vrot.lane.b32.xlu0 %v856, 4
  %v877 = vpop.permute.xlu0 %876
  %878 = vrot.lane.b32.xlu0 %v857, 4
  %v879 = vpop.permute.xlu0 %878
  %880 = vrot.lane.b32.xlu0 %v858, 4
  %v881 = vpop.permute.xlu0 %880
  %882 = vrot.lane.b32.xlu0 %v859, 4
  %v883 = vpop.permute.xlu0 %882
  %v892 = vmul.f32 %v837, %v869
  %v893 = vmul.f32 %v839, %v871
  %v894 = vmul.f32 %v841, %v873
  %v895 = vmul.f32 %v843, %v875
  %v896 = vmul.f32 %v845, %v877
  %v897 = vmul.f32 %v847, %v879
  %v898 = vmul.f32 %v849, %v881
  %v899 = vmul.f32 %v851, %v883
  %908 = vrot.lane.b32.xlu0 %v892, 124
  %v909 = vpop.permute.xlu0 %908
  %910 = vrot.lane.b32.xlu0 %v893, 124
  %v911 = vpop.permute.xlu0 %910
  %912 = vrot.lane.b32.xlu0 %v894, 124
  %v913 = vpop.permute.xlu0 %912
  %914 = vrot.lane.b32.xlu0 %v895, 124
  %v915 = vpop.permute.xlu0 %914
  %916 = vrot.lane.b32.xlu0 %v896, 124
  %v917 = vpop.permute.xlu0 %916
  %918 = vrot.lane.b32.xlu0 %v897, 124
  %v919 = vpop.permute.xlu0 %918
  %920 = vrot.lane.b32.xlu0 %v898, 124
  %v921 = vpop.permute.xlu0 %920
  %922 = vrot.lane.b32.xlu0 %v899, 124
  %v923 = vpop.permute.xlu0 %922
  %v932 = vadd.f32 %v798, %v909
  %v933 = vadd.f32 %v803, %v911
  %v934 = vadd.f32 %v808, %v913
  %v935 = vadd.f32 %v813, %v915
  %v936 = vadd.f32 %v818, %v917
  %v937 = vadd.f32 %v823, %v919
  %v938 = vadd.f32 %v828, %v921
  %v939 = vadd.f32 %v833, %v923
  %v940 = vld [vmem:[%s2] sm:$0xff]
  %v941 = vld [vmem:[%s2 + $0x8] sm:$0xff]
  %v942 = vld [vmem:[%s2 + $0x10] sm:$0xff]
  %v943 = vld [vmem:[%s2 + $0x18] sm:$0xff]
  %v944 = vld [vmem:[%s2 + $0x20] sm:$0xff]
  %v945 = vld [vmem:[%s2 + $0x28] sm:$0xff]
  %v946 = vld [vmem:[%s3] sm:$0xff]
  %v947 = vld [vmem:[%s3 + $0x8] sm:$0xff]
  %v948 = vld [vmem:[%s3 + $0x10] sm:$0xff]
  %v949 = vld [vmem:[%s3 + $0x18] sm:$0xff]
  %v950 = vld [vmem:[%s3 + $0x20] sm:$0xff]
  %v951 = vld [vmem:[%s3 + $0x28] sm:$0xff]
  %v952 = vsub.f32 %v933, %v932
  %v953 = vsub.f32 %v934, %v933
  %v954 = vsub.f32 %v935, %v934
  %v955 = vsub.f32 %v936, %v935
  %v956 = vsub.f32 %v937, %v936
  %v957 = vsub.f32 %v938, %v937
  %959 = vset.pattern.permute.xlu0 1
  %960 = vperm.xlu0 %959, %v946
  %v961 = vpop.permute.xlu0 %960
  %964 = vset.pattern.permute.xlu0 1
  %965 = vperm.xlu0 %964, %v947
  %v966 = vpop.permute.xlu0 %965
  %969 = vset.pattern.permute.xlu0 1
  %970 = vperm.xlu0 %969, %v948
  %v971 = vpop.permute.xlu0 %970
  %974 = vset.pattern.permute.xlu0 1
  %975 = vperm.xlu0 %974, %v949
  %v976 = vpop.permute.xlu0 %975
  %979 = vset.pattern.permute.xlu0 1
  %980 = vperm.xlu0 %979, %v950
  %v981 = vpop.permute.xlu0 %980
  %984 = vset.pattern.permute.xlu0 1
  %985 = vperm.xlu0 %984, %v951
  %v986 = vpop.permute.xlu0 %985
  %v988 = vmul.f32 %v952, %v961
  %v989 = vmul.f32 %v953, %v966
  %v990 = vmul.f32 %v954, %v971
  %v991 = vmul.f32 %v955, %v976
  %v992 = vmul.f32 %v956, %v981
  %v993 = vmul.f32 %v957, %v986
  %v994 = vlaneseq
  %v995 = vshrl.u32 %v994, 7
  %v996 = vsub.s32 3, %v995
  %v997 = vrot.slane %v33, %v996
  %v998 = vmul.f32 %v997, %v933
  %v999 = vmul.f32 %v997, %v934
  %v1000 = vmul.f32 %v997, %v935
  %v1001 = vmul.f32 %v997, %v936
  %v1002 = vmul.f32 %v997, %v937
  %v1003 = vmul.f32 %v997, %v938
  %v1004 = vlaneseq
  %v1005 = vshrl.u32 %v1004, 7
  %v1006 = vsub.s32 4, %v1005
  %v1007 = vrot.slane %v33, %v1006
  %v1008 = vmul.f32 %v1007, %v988
  %v1009 = vmul.f32 %v1007, %v989
  %v1010 = vmul.f32 %v1007, %v990
  %v1011 = vmul.f32 %v1007, %v991
  %v1012 = vmul.f32 %v1007, %v992
  %v1013 = vmul.f32 %v1007, %v993
  %v1014 = vadd.f32 %v998, %v1008
  %v1015 = vadd.f32 %v999, %v1009
  %v1016 = vadd.f32 %v1000, %v1010
  %v1017 = vadd.f32 %v1001, %v1011
  %v1018 = vadd.f32 %v1002, %v1012
  %v1019 = vadd.f32 %v1003, %v1013
  %v1020 = vlaneseq
  %v1021 = vshrl.u32 %v1020, 7
  %v1022 = vsub.s32 5, %v1021
  %v1023 = vrot.slane %v33, %v1022
  %v1024 = vmul.f32 %v1023, %v940
  %v1025 = vmul.f32 %v1023, %v941
  %v1026 = vmul.f32 %v1023, %v942
  %v1027 = vmul.f32 %v1023, %v943
  %v1028 = vmul.f32 %v1023, %v944
  %v1029 = vmul.f32 %v1023, %v945
  %v1030 = vadd.f32 %v1014, %v1024
  %v1031 = vadd.f32 %v1015, %v1025
  %v1032 = vadd.f32 %v1016, %v1026
  %v1033 = vadd.f32 %v1017, %v1027
  %v1034 = vadd.f32 %v1018, %v1028
  %v1035 = vadd.f32 %v1019, %v1029
  %1036 = vset.pattern.permute.xlu0 0
  %1037 = vperm.xlu0 %1036, %v946
  %v1038 = vpop.permute.xlu0 %1037
  %1040 = vset.pattern.permute.xlu0 0
  %1041 = vperm.xlu0 %1040, %v947
  %v1042 = vpop.permute.xlu0 %1041
  %1044 = vset.pattern.permute.xlu0 0
  %1045 = vperm.xlu0 %1044, %v948
  %v1046 = vpop.permute.xlu0 %1045
  %1048 = vset.pattern.permute.xlu0 0
  %1049 = vperm.xlu0 %1048, %v949
  %v1050 = vpop.permute.xlu0 %1049
  %1052 = vset.pattern.permute.xlu0 0
  %1053 = vperm.xlu0 %1052, %v950
  %v1054 = vpop.permute.xlu0 %1053
  %1056 = vset.pattern.permute.xlu0 0
  %1057 = vperm.xlu0 %1056, %v951
  %v1058 = vpop.permute.xlu0 %1057
  %v1060 = vmul.f32 %v1038, %v1030
  %v1061 = vmul.f32 %v1042, %v1031
  %v1062 = vmul.f32 %v1046, %v1032
  %v1063 = vmul.f32 %v1050, %v1033
  %v1064 = vmul.f32 %v1054, %v1034
  %v1065 = vmul.f32 %v1058, %v1035
  %v1066 = vadd.f32 %v988, %v1060
  %v1067 = vadd.f32 %v989, %v1061
  %v1068 = vadd.f32 %v990, %v1062
  %v1069 = vadd.f32 %v991, %v1063
  %v1070 = vadd.f32 %v992, %v1064
  %v1071 = vadd.f32 %v993, %v1065
  %v1072 = vmul.f32 %v1038, %v1066
  %v1073 = vmul.f32 %v1042, %v1067
  %v1074 = vmul.f32 %v1046, %v1068
  %v1075 = vmul.f32 %v1050, %v1069
  %v1076 = vmul.f32 %v1054, %v1070
  %v1077 = vmul.f32 %v1058, %v1071
  %v1078 = vadd.f32 %v933, %v1072
  %v1079 = vadd.f32 %v934, %v1073
  %v1080 = vadd.f32 %v935, %v1074
  %v1081 = vadd.f32 %v936, %v1075
  %v1082 = vadd.f32 %v937, %v1076
  %v1083 = vadd.f32 %v938, %v1077
  %v1084 = vsub.f32 0.0, %v808
  %v1085 = vsub.f32 0.0, %v813
  %v1086 = vsub.f32 0.0, %v818
  %v1087 = vsub.f32 0.0, %v823
  %v1088 = vsub.f32 0.0, %v828
  %v1089 = vsub.f32 0.0, %v833
  %v1090 = vmul.f32 %v841, %v841
  %v1091 = vmul.f32 %v843, %v843
  %v1092 = vmul.f32 %v845, %v845
  %v1093 = vmul.f32 %v847, %v847
  %v1094 = vmul.f32 %v849, %v849
  %v1095 = vmul.f32 %v851, %v851
  %v1096 = vsub.f32 %v808, %v1078
  %v1097 = vsub.f32 %v813, %v1079
  %v1098 = vsub.f32 %v818, %v1080
  %v1099 = vsub.f32 %v823, %v1081
  %v1100 = vsub.f32 %v828, %v1082
  %v1101 = vsub.f32 %v833, %v1083
  %v1102 = vmul.f32 %v1096, %v1096
  %v1103 = vmul.f32 %v1097, %v1097
  %v1104 = vmul.f32 %v1098, %v1098
  %v1105 = vmul.f32 %v1099, %v1099
  %v1106 = vmul.f32 %v1100, %v1100
  %v1107 = vmul.f32 %v1101, %v1101
  %1114 = vrot.lane.b32.xlu0 %v1102, 4
  %v1115 = vpop.permute.xlu0 %1114
  %1116 = vrot.lane.b32.xlu0 %v1103, 4
  %v1117 = vpop.permute.xlu0 %1116
  %1118 = vrot.lane.b32.xlu0 %v1104, 4
  %v1119 = vpop.permute.xlu0 %1118
  %1120 = vrot.lane.b32.xlu0 %v1105, 4
  %v1121 = vpop.permute.xlu0 %1120
  %1122 = vrot.lane.b32.xlu0 %v1106, 4
  %v1123 = vpop.permute.xlu0 %1122
  %1124 = vrot.lane.b32.xlu0 %v1107, 4
  %v1125 = vpop.permute.xlu0 %1124
  %v1132 = vadd.f32 %v1090, %v1115
  %v1133 = vadd.f32 %v1091, %v1117
  %v1134 = vadd.f32 %v1092, %v1119
  %v1135 = vadd.f32 %v1093, %v1121
  %v1136 = vadd.f32 %v1094, %v1123
  %v1137 = vadd.f32 %v1095, %v1125
  %v1138 = vmul.f32 %v1132, 0.5
  %v1139 = vmul.f32 %v1133, 0.5
  %v1140 = vmul.f32 %v1134, 0.5
  %v1141 = vmul.f32 %v1135, 0.5
  %v1142 = vmul.f32 %v1136, 0.5
  %v1143 = vmul.f32 %v1137, 0.5
  %v1144 = vadd.f32 %v1084, %v1138
  %v1145 = vadd.f32 %v1085, %v1139
  %v1146 = vadd.f32 %v1086, %v1140
  %v1147 = vadd.f32 %v1087, %v1141
  %v1148 = vadd.f32 %v1088, %v1142
  %v1149 = vadd.f32 %v1089, %v1143
  %v1150 = vsub.f32 %v1144, 0.5
  %v1151 = vsub.f32 %v1145, 0.5
  %v1152 = vsub.f32 %v1146, 0.5
  %v1153 = vsub.f32 %v1147, 0.5
  %v1154 = vsub.f32 %v1148, 0.5
  %v1155 = vsub.f32 %v1149, 0.5
  %1162 = vrot.lane.b32.xlu0 %v1150, 124
  %v1163 = vpop.permute.xlu0 %1162
  %1164 = vrot.lane.b32.xlu0 %v1151, 124
  %v1165 = vpop.permute.xlu0 %1164
  %1166 = vrot.lane.b32.xlu0 %v1152, 124
  %v1167 = vpop.permute.xlu0 %1166
  %1168 = vrot.lane.b32.xlu0 %v1153, 124
  %v1169 = vpop.permute.xlu0 %1168
  %1170 = vrot.lane.b32.xlu0 %v1154, 124
  %v1171 = vpop.permute.xlu0 %1170
  %1172 = vrot.lane.b32.xlu0 %v1155, 124
  %v1173 = vpop.permute.xlu0 %1172
  %vm1180 = vcmask 31744
  %v1181 = vsel %vm1180, %v1163, 0.0
  %1182 = vadd.xlane.f32.xlu0 %v1181
  %v1183 = vpop.xlane.xlu0 %1182
  %v1184 = vsel %vm1180, %v1165, 0.0
  %1185 = vadd.xlane.f32.xlu0 %v1184
  %v1186 = vpop.xlane.xlu0 %1185
  %v1187 = vsel %vm1180, %v1167, 0.0
  %1188 = vadd.xlane.f32.xlu0 %v1187
  %v1189 = vpop.xlane.xlu0 %1188
  %v1190 = vsel %vm1180, %v1169, 0.0
  %1191 = vadd.xlane.f32.xlu0 %v1190
  %v1192 = vpop.xlane.xlu0 %1191
  %v1193 = vsel %vm1180, %v1171, 0.0
  %1194 = vadd.xlane.f32.xlu0 %v1193
  %v1195 = vpop.xlane.xlu0 %1194
  %v1196 = vsel %vm1180, %v1173, 0.0
  %1197 = vadd.xlane.f32.xlu0 %v1196
  %v1198 = vpop.xlane.xlu0 %1197
  %v1199 = vadd.f32 %v1183, %v1186
  %v1200 = vadd.f32 %v1199, %v1189
  %v1201 = vadd.f32 %v1200, %v1192
  %v1202 = vadd.f32 %v1201, %v1195
  %v1203 = vadd.f32 %v1202, %v1198
  %v1204 = vrot.slane %v1203, 4
  %v1205 = vadd.f32 %v1203, %v1204
  %v1206 = vrot.slane %v1205, 2
  %v1207 = vadd.f32 %v1205, %v1206
  %v1208 = vrot.slane %v1207, 1
  %v1209 = vadd.f32 %v1207, %v1208
  %v1210 = vrcp.pop 8.0
  %v1211 = vmul.f32 %v1209, %v1210
  %1213 = vset.pattern.permute.xlu0 0
  %1214 = vperm.xlu0 %1213, %v934
  %v1215 = vpop.permute.xlu0 %1214
  %1218 = vset.pattern.permute.xlu0 0
  %1219 = vperm.xlu0 %1218, %v935
  %v1220 = vpop.permute.xlu0 %1219
  %1223 = vset.pattern.permute.xlu0 0
  %1224 = vperm.xlu0 %1223, %v936
  %v1225 = vpop.permute.xlu0 %1224
  %1228 = vset.pattern.permute.xlu0 0
  %1229 = vperm.xlu0 %1228, %v937
  %v1230 = vpop.permute.xlu0 %1229
  %1233 = vset.pattern.permute.xlu0 0
  %1234 = vperm.xlu0 %1233, %v938
  %v1235 = vpop.permute.xlu0 %1234
  %1238 = vset.pattern.permute.xlu0 0
  %1239 = vperm.xlu0 %1238, %v939
  %v1240 = vpop.permute.xlu0 %1239
  %v1242 = vlaneseq
  %v1243 = vshrl.u32 %v1242, 7
  %v1244 = vsub.s32 6, %v1243
  %v1245 = vrot.slane %v33, %v1244
  %v1246 = vmul.f32 %v1215, %v1245
  %v1247 = vmul.f32 %v1220, %v1245
  %v1248 = vmul.f32 %v1225, %v1245
  %v1249 = vmul.f32 %v1230, %v1245
  %v1250 = vmul.f32 %v1235, %v1245
  %v1251 = vmul.f32 %v1240, %v1245
  %v1252 = vlaneseq
  %v1253 = vshrl.u32 %v1252, 7
  %v1254 = vsub.s32 2, %v1253
  %v1255 = vrot.slane %v33, %v1254
  %v1256 = vadd.f32 %v1255, %v1246
  %v1257 = vadd.f32 %v1255, %v1247
  %v1258 = vadd.f32 %v1255, %v1248
  %v1259 = vadd.f32 %v1255, %v1249
  %v1260 = vadd.f32 %v1255, %v1250
  %v1261 = vadd.f32 %v1255, %v1251
  %1262 = vset.pattern.permute.xlu0 1
  %1263 = vperm.xlu0 %1262, %v934
  %v1264 = vpop.permute.xlu0 %1263
  %1266 = vset.pattern.permute.xlu0 1
  %1267 = vperm.xlu0 %1266, %v935
  %v1268 = vpop.permute.xlu0 %1267
  %1270 = vset.pattern.permute.xlu0 1
  %1271 = vperm.xlu0 %1270, %v936
  %v1272 = vpop.permute.xlu0 %1271
  %1274 = vset.pattern.permute.xlu0 1
  %1275 = vperm.xlu0 %1274, %v937
  %v1276 = vpop.permute.xlu0 %1275
  %1278 = vset.pattern.permute.xlu0 1
  %1279 = vperm.xlu0 %1278, %v938
  %v1280 = vpop.permute.xlu0 %1279
  %1282 = vset.pattern.permute.xlu0 1
  %1283 = vperm.xlu0 %1282, %v939
  %v1284 = vpop.permute.xlu0 %1283
  %v1286 = vlaneseq
  %v1287 = vshrl.u32 %v1286, 7
  %v1288 = vsub.s32 7, %v1287
  %v1289 = vrot.slane %v33, %v1288
  %v1290 = vmul.f32 %v1264, %v1289
  %v1291 = vmul.f32 %v1268, %v1289
  %v1292 = vmul.f32 %v1272, %v1289
  %v1293 = vmul.f32 %v1276, %v1289
  %v1294 = vmul.f32 %v1280, %v1289
  %v1295 = vmul.f32 %v1284, %v1289
  %v1296 = vadd.f32 %v1256, %v1290
  %v1297 = vadd.f32 %v1257, %v1291
  %v1298 = vadd.f32 %v1258, %v1292
  %v1299 = vadd.f32 %v1259, %v1293
  %v1300 = vadd.f32 %v1260, %v1294
  %v1301 = vadd.f32 %v1261, %v1295
  %1302 = vset.pattern.permute.xlu0 2
  %1303 = vperm.xlu0 %1302, %v934
  %v1304 = vpop.permute.xlu0 %1303
  %1306 = vset.pattern.permute.xlu0 2
  %1307 = vperm.xlu0 %1306, %v935
  %v1308 = vpop.permute.xlu0 %1307
  %1310 = vset.pattern.permute.xlu0 2
  %1311 = vperm.xlu0 %1310, %v936
  %v1312 = vpop.permute.xlu0 %1311
  %1314 = vset.pattern.permute.xlu0 2
  %1315 = vperm.xlu0 %1314, %v937
  %v1316 = vpop.permute.xlu0 %1315
  %1318 = vset.pattern.permute.xlu0 2
  %1319 = vperm.xlu0 %1318, %v938
  %v1320 = vpop.permute.xlu0 %1319
  %1322 = vset.pattern.permute.xlu0 2
  %1323 = vperm.xlu0 %1322, %v939
  %v1324 = vpop.permute.xlu0 %1323
  %v1326 = vlaneseq
  %v1327 = vshrl.u32 %v1326, 7
  %v1328 = vsub.s32 0, %v1327
  %v1329 = vrot.slane %v34, %v1328
  %v1330 = vmul.f32 %v1304, %v1329
  %v1331 = vmul.f32 %v1308, %v1329
  %v1332 = vmul.f32 %v1312, %v1329
  %v1333 = vmul.f32 %v1316, %v1329
  %v1334 = vmul.f32 %v1320, %v1329
  %v1335 = vmul.f32 %v1324, %v1329
  %v1336 = vadd.f32 %v1296, %v1330
  %v1337 = vadd.f32 %v1297, %v1331
  %v1338 = vadd.f32 %v1298, %v1332
  %v1339 = vadd.f32 %v1299, %v1333
  %v1340 = vadd.f32 %v1300, %v1334
  %v1341 = vadd.f32 %v1301, %v1335
  %1342 = vset.pattern.permute.xlu0 3
  %1343 = vperm.xlu0 %1342, %v934
  %v1344 = vpop.permute.xlu0 %1343
  %1346 = vset.pattern.permute.xlu0 3
  %1347 = vperm.xlu0 %1346, %v935
  %v1348 = vpop.permute.xlu0 %1347
  %1350 = vset.pattern.permute.xlu0 3
  %1351 = vperm.xlu0 %1350, %v936
  %v1352 = vpop.permute.xlu0 %1351
  %1354 = vset.pattern.permute.xlu0 3
  %1355 = vperm.xlu0 %1354, %v937
  %v1356 = vpop.permute.xlu0 %1355
  %1358 = vset.pattern.permute.xlu0 3
  %1359 = vperm.xlu0 %1358, %v938
  %v1360 = vpop.permute.xlu0 %1359
  %1362 = vset.pattern.permute.xlu0 3
  %1363 = vperm.xlu0 %1362, %v939
  %v1364 = vpop.permute.xlu0 %1363
  %v1366 = vlaneseq
  %v1367 = vshrl.u32 %v1366, 7
  %v1368 = vsub.s32 1, %v1367
  %v1369 = vrot.slane %v34, %v1368
  %v1370 = vmul.f32 %v1344, %v1369
  %v1371 = vmul.f32 %v1348, %v1369
  %v1372 = vmul.f32 %v1352, %v1369
  %v1373 = vmul.f32 %v1356, %v1369
  %v1374 = vmul.f32 %v1360, %v1369
  %v1375 = vmul.f32 %v1364, %v1369
  %v1376 = vadd.f32 %v1336, %v1370
  %v1377 = vadd.f32 %v1337, %v1371
  %v1378 = vadd.f32 %v1338, %v1372
  %v1379 = vadd.f32 %v1339, %v1373
  %v1380 = vadd.f32 %v1340, %v1374
  %v1381 = vadd.f32 %v1341, %v1375
  %v1382 = vmax.f32 %v1376, 0.0
  %v1383 = vmax.f32 %v1377, 0.0
  %v1384 = vmax.f32 %v1378, 0.0
  %v1385 = vmax.f32 %v1379, 0.0
  %v1386 = vmax.f32 %v1380, 0.0
  %v1387 = vmax.f32 %v1381, 0.0
  %v1388 = vpack.c.bf16 %v1383, %v1382
  %v1389 = vpack.c.bf16 %v1385, %v1384
  %v1390 = vpack.c.bf16 %v1387, %v1386
  %v1391 = vld [vmem:[%s6] sm:$0xff]
  %v1392 = vld [vmem:[%s6 + $0x8] sm:$0xff]
  %v1393 = vld [vmem:[%s6 + $0x10] sm:$0xff]
  %v1394 = vld [vmem:[%s6 + $0x18] sm:$0xff]
  %v1395 = vld [vmem:[%s6 + $0x20] sm:$0xff]
  %v1396 = vld [vmem:[%s6 + $0x28] sm:$0xff]
  %v1397 = vld [vmem:[%s6 + $0x30] sm:$0xff]
  %v1398 = vld [vmem:[%s6 + $0x38] sm:$0xff]
  %v1399 = vld [vmem:[%s6 + $0x40] sm:$0xff]
  %v1400 = vld [vmem:[%s6 + $0x48] sm:$0xff]
  %v1401 = vld [vmem:[%s6 + $0x50] sm:$0xff]
  %v1402 = vld [vmem:[%s6 + $0x58] sm:$0xff]
  %v1403 = vld [vmem:[%s7] sm:$0x3f]
  %v1405 = vlaneseq
  %v1406 = vshrl.u32 %v1405, 7
  %v1407 = vsub.s32 0, %v1406
  %v1408 = vrot.slane %v1403, %v1407
  %v1409 = vlaneseq
  %v1410 = vshrl.u32 %v1409, 7
  %v1411 = vsub.s32 1, %v1410
  %v1412 = vrot.slane %v1403, %v1411
  %v1413 = vlaneseq
  %v1414 = vshrl.u32 %v1413, 7
  %v1415 = vsub.s32 2, %v1414
  %v1416 = vrot.slane %v1403, %v1415
  %v1417 = vlaneseq
  %v1418 = vshrl.u32 %v1417, 7
  %v1419 = vsub.s32 3, %v1418
  %v1420 = vrot.slane %v1403, %v1419
  %v1421 = vlaneseq
  %v1422 = vshrl.u32 %v1421, 7
  %v1423 = vsub.s32 4, %v1422
  %v1424 = vrot.slane %v1403, %v1423
  %v1425 = vlaneseq
  %v1426 = vshrl.u32 %v1425, 7
  %v1427 = vsub.s32 5, %v1426
  %v1428 = vrot.slane %v1403, %v1427
  %v1447 = vunpack.c.l.b16 %v1391
  %v1448 = vunpack.c.h.b16 %v1391
  %v1449 = vunpack.c.l.b16 %v1392
  %v1450 = vunpack.c.h.b16 %v1392
  %v1451 = vunpack.c.l.b16 %v1393
  %v1452 = vunpack.c.h.b16 %v1393
  %v1453 = vunpack.c.l.b16 %v1394
  %v1454 = vunpack.c.h.b16 %v1394
  %v1455 = vunpack.c.l.b16 %v1395
  %v1456 = vunpack.c.h.b16 %v1395
  %v1457 = vunpack.c.l.b16 %v1396
  %v1458 = vunpack.c.h.b16 %v1396
  %v1459 = vunpack.c.l.b16 %v1397
  %v1460 = vunpack.c.h.b16 %v1397
  %v1461 = vunpack.c.l.b16 %v1398
  %v1462 = vunpack.c.h.b16 %v1398
  %v1463 = vunpack.c.l.b16 %v1399
  %v1464 = vunpack.c.h.b16 %v1399
  %v1465 = vunpack.c.l.b16 %v1400
  %v1466 = vunpack.c.h.b16 %v1400
  %v1467 = vunpack.c.l.b16 %v1401
  %v1468 = vunpack.c.h.b16 %v1401
  %v1469 = vunpack.c.l.b16 %v1402
  %v1470 = vunpack.c.h.b16 %v1402
  %v1471 = vpack.c.b16 %v1453, %v1447
  %v1472 = vpack.c.b16 %v1454, %v1448
  %v1473 = vpack.c.b16 %v1455, %v1449
  %v1474 = vpack.c.b16 %v1456, %v1450
  %v1475 = vpack.c.b16 %v1457, %v1451
  %v1476 = vpack.c.b16 %v1458, %v1452
  %v1477 = vpack.c.b16 %v1465, %v1459
  %v1478 = vpack.c.b16 %v1466, %v1460
  %v1479 = vpack.c.b16 %v1467, %v1461
  %v1480 = vpack.c.b16 %v1468, %v1462
  %v1481 = vpack.c.b16 %v1469, %v1463
  %v1482 = vpack.c.b16 %v1470, %v1464
  %v1496 = vsel %vm706, %v1388, 0
  %v1499 = vsel %vm706, %v1389, 0
  %v1502 = vsel %vm706, %v1390, 0
  %1504 = vmatprep.subr.bf16.mxu0 %v1472
  %1505 = vmatpush1.bf16.msra.mxu0 %v1471
  %1506 = vmatprep.subr.bf16.mxu0 %v1478
  %1507 = vmatpush1.bf16.msra.mxu0 %v1477
  %1508 = vmatprep.subr.bf16.mxu0 0
  %1509 = vmatpush1.bf16.msra.mxu0 0
  %1510 = vmatprep.subr.bf16.mxu0 0
  %1511 = vmatpush1.bf16.msra.mxu0 0
  %1512 = vmatprep.subr.bf16.mxu0 0
  %1513 = vmatpush1.bf16.msra.mxu0 0
  %1514 = vmatprep.subr.bf16.mxu0 0
  %1515 = vmatpush1.bf16.msra.mxu0 0
  %1516 = vmatprep.subr.bf16.mxu0 0
  %1517 = vmatpush1.bf16.msra.mxu0 0
  %1518 = vmatprep.subr.bf16.mxu0 0
  %1519 = vmatpush1.bf16.msra.mxu0 0
  %1520 = vmatprep.subr.bf16.mxu0 0
  %1521 = vmatpush1.bf16.msra.mxu0 0
  %1522 = vmatprep.subr.bf16.mxu0 0
  %1523 = vmatpush1.bf16.msra.mxu0 0
  %1524 = vmatprep.subr.bf16.mxu0 0
  %1525 = vmatpush1.bf16.msra.mxu0 0
  %1526 = vmatprep.subr.bf16.mxu0 0
  %1527 = vmatpush1.bf16.msra.mxu0 0
  %1528 = vmatprep.subr.bf16.mxu0 0
  %1529 = vmatpush1.bf16.msra.mxu0 0
  %1530 = vmatprep.subr.bf16.mxu0 0
  %1531 = vmatpush1.bf16.msra.mxu0 0
  %1532 = vmatprep.subr.bf16.mxu0 0
  %1533 = vmatpush1.bf16.msra.mxu0 0
  %1534 = vmatprep.subr.bf16.mxu0 0
  %1535 = vmatpush1.bf16.msra.mxu0 0
  %1536 = vmatprep.mubr.bf16.mxu0 0
  %1537 = vmatmul.mubr.bf16.gmra.mrb[0].mxu0 %v1496
  %v1538 = vpop.f32.mrb[0].mxu0
  %v1539 = vadd.f32 %v1408, %v1538
  %v1540 = vpop.f32.mrb[0].mxu0
  %v1541 = vadd.f32 %v1412, %v1540
  %v1542 = vpop.f32.mrb[0].mxu0
  %v1543 = vadd.f32 %v1408, %v1542
  %v1544 = vpop.f32.mrb[0].mxu0
  %v1545 = vadd.f32 %v1412, %v1544
  %1546 = vmatprep.mubr.bf16.mxu0 0
  %1547 = vmatmul.mubr.bf16.gmra.mrb[0].mxu0 %v1499
  %v1548 = vpop.f32.mrb[0].mxu0
  %v1549 = vadd.f32 %v1408, %v1548
  %v1550 = vpop.f32.mrb[0].mxu0
  %v1551 = vadd.f32 %v1412, %v1550
  %v1552 = vpop.f32.mrb[0].mxu0
  %v1553 = vadd.f32 %v1408, %v1552
  %v1554 = vpop.f32.mrb[0].mxu0
  %v1555 = vadd.f32 %v1412, %v1554
  %1556 = vmatprep.mubr.bf16.mxu0 0
  %1557 = vmatmul.mubr.bf16.gmra.mrb[0].mxu0 %v1502
  %v1558 = vpop.f32.mrb[0].mxu0
  %v1559 = vadd.f32 %v1408, %v1558
  %v1560 = vpop.f32.mrb[0].mxu0
  %v1561 = vadd.f32 %v1412, %v1560
  %v1562 = vpop.f32.mrb[0].mxu0
  %v1563 = vadd.f32 %v1408, %v1562
  %v1564 = vpop.f32.mrb[0].mxu0
  %v1565 = vadd.f32 %v1412, %v1564
  %1566 = vdwg.mxu0
  %1567 = vmatprep.subr.bf16.mxu0 %v1474
  %1568 = vmatpush1.bf16.msra.mxu0 %v1473
  %1569 = vmatprep.subr.bf16.mxu0 %v1480
  %1570 = vmatpush1.bf16.msra.mxu0 %v1479
  %1571 = vmatprep.subr.bf16.mxu0 0
  %1572 = vmatpush1.bf16.msra.mxu0 0
  %1573 = vmatprep.subr.bf16.mxu0 0
  %1574 = vmatpush1.bf16.msra.mxu0 0
  %1575 = vmatprep.subr.bf16.mxu0 0
  %1576 = vmatpush1.bf16.msra.mxu0 0
  %1577 = vmatprep.subr.bf16.mxu0 0
  %1578 = vmatpush1.bf16.msra.mxu0 0
  %1579 = vmatprep.subr.bf16.mxu0 0
  %1580 = vmatpush1.bf16.msra.mxu0 0
  %1581 = vmatprep.subr.bf16.mxu0 0
  %1582 = vmatpush1.bf16.msra.mxu0 0
  %1583 = vmatprep.subr.bf16.mxu0 0
  %1584 = vmatpush1.bf16.msra.mxu0 0
  %1585 = vmatprep.subr.bf16.mxu0 0
  %1586 = vmatpush1.bf16.msra.mxu0 0
  %1587 = vmatprep.subr.bf16.mxu0 0
  %1588 = vmatpush1.bf16.msra.mxu0 0
  %1589 = vmatprep.subr.bf16.mxu0 0
  %1590 = vmatpush1.bf16.msra.mxu0 0
  %1591 = vmatprep.subr.bf16.mxu0 0
  %1592 = vmatpush1.bf16.msra.mxu0 0
  %1593 = vmatprep.subr.bf16.mxu0 0
  %1594 = vmatpush1.bf16.msra.mxu0 0
  %1595 = vmatprep.subr.bf16.mxu0 0
  %1596 = vmatpush1.bf16.msra.mxu0 0
  %1597 = vmatprep.subr.bf16.mxu0 0
  %1598 = vmatpush1.bf16.msra.mxu0 0
  %1599 = vmatprep.mubr.bf16.mxu0 0
  %1600 = vmatmul.mubr.bf16.gmra.mrb[0].mxu0 %v1496
  %v1601 = vpop.f32.mrb[0].mxu0
  %v1602 = vadd.f32 %v1416, %v1601
  %v1603 = vpop.f32.mrb[0].mxu0
  %v1604 = vadd.f32 %v1420, %v1603
  %v1605 = vpop.f32.mrb[0].mxu0
  %v1606 = vadd.f32 %v1416, %v1605
  %v1607 = vpop.f32.mrb[0].mxu0
  %v1608 = vadd.f32 %v1420, %v1607
  %1609 = vmatprep.mubr.bf16.mxu0 0
  %1610 = vmatmul.mubr.bf16.gmra.mrb[0].mxu0 %v1499
  %v1611 = vpop.f32.mrb[0].mxu0
  %v1612 = vadd.f32 %v1416, %v1611
  %v1613 = vpop.f32.mrb[0].mxu0
  %v1614 = vadd.f32 %v1420, %v1613
  %v1615 = vpop.f32.mrb[0].mxu0
  %v1616 = vadd.f32 %v1416, %v1615
  %v1617 = vpop.f32.mrb[0].mxu0
  %v1618 = vadd.f32 %v1420, %v1617
  %1619 = vmatprep.mubr.bf16.mxu0 0
  %1620 = vmatmul.mubr.bf16.gmra.mrb[0].mxu0 %v1502
  %v1621 = vpop.f32.mrb[0].mxu0
  %v1622 = vadd.f32 %v1416, %v1621
  %v1623 = vpop.f32.mrb[0].mxu0
  %v1624 = vadd.f32 %v1420, %v1623
  %v1625 = vpop.f32.mrb[0].mxu0
  %v1626 = vadd.f32 %v1416, %v1625
  %v1627 = vpop.f32.mrb[0].mxu0
  %v1628 = vadd.f32 %v1420, %v1627
  %1629 = vdwg.mxu0
  %1630 = vmatprep.subr.bf16.mxu0 %v1476
  %1631 = vmatpush1.bf16.msra.mxu0 %v1475
  %1632 = vmatprep.subr.bf16.mxu0 %v1482
  %1633 = vmatpush1.bf16.msra.mxu0 %v1481
  %1634 = vmatprep.subr.bf16.mxu0 0
  %1635 = vmatpush1.bf16.msra.mxu0 0
  %1636 = vmatprep.subr.bf16.mxu0 0
  %1637 = vmatpush1.bf16.msra.mxu0 0
  %1638 = vmatprep.subr.bf16.mxu0 0
  %1639 = vmatpush1.bf16.msra.mxu0 0
  %1640 = vmatprep.subr.bf16.mxu0 0
  %1641 = vmatpush1.bf16.msra.mxu0 0
  %1642 = vmatprep.subr.bf16.mxu0 0
  %1643 = vmatpush1.bf16.msra.mxu0 0
  %1644 = vmatprep.subr.bf16.mxu0 0
  %1645 = vmatpush1.bf16.msra.mxu0 0
  %1646 = vmatprep.subr.bf16.mxu0 0
  %1647 = vmatpush1.bf16.msra.mxu0 0
  %1648 = vmatprep.subr.bf16.mxu0 0
  %1649 = vmatpush1.bf16.msra.mxu0 0
  %1650 = vmatprep.subr.bf16.mxu0 0
  %1651 = vmatpush1.bf16.msra.mxu0 0
  %1652 = vmatprep.subr.bf16.mxu0 0
  %1653 = vmatpush1.bf16.msra.mxu0 0
  %1654 = vmatprep.subr.bf16.mxu0 0
  %1655 = vmatpush1.bf16.msra.mxu0 0
  %1656 = vmatprep.subr.bf16.mxu0 0
  %1657 = vmatpush1.bf16.msra.mxu0 0
  %1658 = vmatprep.subr.bf16.mxu0 0
  %1659 = vmatpush1.bf16.msra.mxu0 0
  %1660 = vmatprep.subr.bf16.mxu0 0
  %1661 = vmatpush1.bf16.msra.mxu0 0
  %1662 = vmatprep.mubr.bf16.mxu0 0
  %1663 = vmatmul.mubr.bf16.gmra.mrb[0].mxu0 %v1496
  %v1664 = vpop.f32.mrb[0].mxu0
  %v1665 = vadd.f32 %v1424, %v1664
  %v1666 = vpop.f32.mrb[0].mxu0
  %v1667 = vadd.f32 %v1428, %v1666
  %v1668 = vpop.f32.mrb[0].mxu0
  %v1669 = vadd.f32 %v1424, %v1668
  %v1670 = vpop.f32.mrb[0].mxu0
  %v1671 = vadd.f32 %v1428, %v1670
  %1672 = vmatprep.mubr.bf16.mxu0 0
  %1673 = vmatmul.mubr.bf16.gmra.mrb[0].mxu0 %v1499
  %v1674 = vpop.f32.mrb[0].mxu0
  %v1675 = vadd.f32 %v1424, %v1674
  %v1676 = vpop.f32.mrb[0].mxu0
  %v1677 = vadd.f32 %v1428, %v1676
  %v1678 = vpop.f32.mrb[0].mxu0
  %v1679 = vadd.f32 %v1424, %v1678
  %v1680 = vpop.f32.mrb[0].mxu0
  %v1681 = vadd.f32 %v1428, %v1680
  %1682 = vmatprep.mubr.bf16.mxu0 0
  %1683 = vmatmul.mubr.bf16.gmra.mrb[0].mxu0 %v1502
  %v1684 = vpop.f32.mrb[0].mxu0
  %v1685 = vadd.f32 %v1424, %v1684
  %v1686 = vpop.f32.mrb[0].mxu0
  %v1687 = vadd.f32 %v1428, %v1686
  %v1688 = vpop.f32.mrb[0].mxu0
  %v1689 = vadd.f32 %v1424, %v1688
  %v1690 = vpop.f32.mrb[0].mxu0
  %v1691 = vadd.f32 %v1428, %v1690
  %1692 = vdwg.mxu0
  %v1693 = vsub.f32 %v47, %v1539
  %v1694 = vsub.f32 %v48, %v1541
  %v1695 = vsub.f32 %v49, %v1602
  %v1696 = vsub.f32 %v50, %v1604
  %v1697 = vsub.f32 %v51, %v1665
  %v1698 = vsub.f32 %v52, %v1667
  %v1699 = vsub.f32 %v53, %v1543
  %v1700 = vsub.f32 %v54, %v1545
  %v1701 = vsub.f32 %v55, %v1606
  %v1702 = vsub.f32 %v56, %v1608
  %v1703 = vsub.f32 %v57, %v1669
  %v1704 = vsub.f32 %v58, %v1671
  %v1705 = vsub.f32 %v59, %v1549
  %v1706 = vsub.f32 %v60, %v1551
  %v1707 = vsub.f32 %v61, %v1612
  %v1708 = vsub.f32 %v62, %v1614
  %v1709 = vsub.f32 %v63, %v1675
  %v1710 = vsub.f32 %v64, %v1677
  %v1711 = vsub.f32 %v65, %v1553
  %v1712 = vsub.f32 %v66, %v1555
  %v1713 = vsub.f32 %v67, %v1616
  %v1714 = vsub.f32 %v68, %v1618
  %v1715 = vsub.f32 %v69, %v1679
  %v1716 = vsub.f32 %v70, %v1681
  %v1717 = vsub.f32 %v71, %v1559
  %v1718 = vsub.f32 %v72, %v1561
  %v1719 = vsub.f32 %v73, %v1622
  %v1720 = vsub.f32 %v74, %v1624
  %v1721 = vsub.f32 %v75, %v1685
  %v1722 = vsub.f32 %v76, %v1687
  %v1723 = vsub.f32 %v77, %v1563
  %v1724 = vsub.f32 %v78, %v1565
  %v1725 = vsub.f32 %v79, %v1626
  %v1726 = vsub.f32 %v80, %v1628
  %v1727 = vsub.f32 %v81, %v1689
  %v1728 = vsub.f32 %v82, %v1691
  %v1729 = vmul.f32 %v1693, %v1693
  %v1730 = vmul.f32 %v1694, %v1694
  %v1731 = vmul.f32 %v1695, %v1695
  %v1732 = vmul.f32 %v1696, %v1696
  %v1733 = vmul.f32 %v1697, %v1697
  %v1734 = vmul.f32 %v1698, %v1698
  %v1735 = vmul.f32 %v1699, %v1699
  %v1736 = vmul.f32 %v1700, %v1700
  %v1737 = vmul.f32 %v1701, %v1701
  %v1738 = vmul.f32 %v1702, %v1702
  %v1739 = vmul.f32 %v1703, %v1703
  %v1740 = vmul.f32 %v1704, %v1704
  %v1741 = vmul.f32 %v1705, %v1705
  %v1742 = vmul.f32 %v1706, %v1706
  %v1743 = vmul.f32 %v1707, %v1707
  %v1744 = vmul.f32 %v1708, %v1708
  %v1745 = vmul.f32 %v1709, %v1709
  %v1746 = vmul.f32 %v1710, %v1710
  %v1747 = vmul.f32 %v1711, %v1711
  %v1748 = vmul.f32 %v1712, %v1712
  %v1749 = vmul.f32 %v1713, %v1713
  %v1750 = vmul.f32 %v1714, %v1714
  %v1751 = vmul.f32 %v1715, %v1715
  %v1752 = vmul.f32 %v1716, %v1716
  %v1753 = vmul.f32 %v1717, %v1717
  %v1754 = vmul.f32 %v1718, %v1718
  %v1755 = vmul.f32 %v1719, %v1719
  %v1756 = vmul.f32 %v1720, %v1720
  %v1757 = vmul.f32 %v1721, %v1721
  %v1758 = vmul.f32 %v1722, %v1722
  %v1759 = vmul.f32 %v1723, %v1723
  %v1760 = vmul.f32 %v1724, %v1724
  %v1761 = vmul.f32 %v1725, %v1725
  %v1762 = vmul.f32 %v1726, %v1726
  %v1763 = vmul.f32 %v1727, %v1727
  %v1764 = vmul.f32 %v1728, %v1728
  %v1765 = vadd.f32 %v1729, %v1730
  %v1766 = vadd.f32 %v1765, %v1731
  %v1767 = vadd.f32 %v1766, %v1732
  %v1768 = vadd.f32 %v1767, %v1733
  %v1769 = vadd.f32 %v1768, %v1734
  %1770 = vadd.xlane.f32.xlu0 %v1769
  %v1771 = vpop.xlane.xlu0 %1770
  %v1772 = vadd.f32 %v1735, %v1736
  %v1773 = vadd.f32 %v1772, %v1737
  %v1774 = vadd.f32 %v1773, %v1738
  %v1775 = vadd.f32 %v1774, %v1739
  %v1776 = vadd.f32 %v1775, %v1740
  %1777 = vadd.xlane.f32.xlu0 %v1776
  %v1778 = vpop.xlane.xlu0 %1777
  %v1779 = vadd.f32 %v1741, %v1742
  %v1780 = vadd.f32 %v1779, %v1743
  %v1781 = vadd.f32 %v1780, %v1744
  %v1782 = vadd.f32 %v1781, %v1745
  %v1783 = vadd.f32 %v1782, %v1746
  %1784 = vadd.xlane.f32.xlu0 %v1783
  %v1785 = vpop.xlane.xlu0 %1784
  %v1786 = vadd.f32 %v1747, %v1748
  %v1787 = vadd.f32 %v1786, %v1749
  %v1788 = vadd.f32 %v1787, %v1750
  %v1789 = vadd.f32 %v1788, %v1751
  %v1790 = vadd.f32 %v1789, %v1752
  %1791 = vadd.xlane.f32.xlu0 %v1790
  %v1792 = vpop.xlane.xlu0 %1791
  %v1793 = vadd.f32 %v1753, %v1754
  %v1794 = vadd.f32 %v1793, %v1755
  %v1795 = vadd.f32 %v1794, %v1756
  %v1796 = vadd.f32 %v1795, %v1757
  %v1797 = vadd.f32 %v1796, %v1758
  %1798 = vadd.xlane.f32.xlu0 %v1797
  %v1799 = vpop.xlane.xlu0 %1798
  %v1800 = vadd.f32 %v1759, %v1760
  %v1801 = vadd.f32 %v1800, %v1761
  %v1802 = vadd.f32 %v1801, %v1762
  %v1803 = vadd.f32 %v1802, %v1763
  %v1804 = vadd.f32 %v1803, %v1764
  %1805 = vadd.xlane.f32.xlu0 %v1804
  %v1806 = vpop.xlane.xlu0 %1805
  %v1807 = vadd.f32 %v1771, %v1778
  %v1808 = vadd.f32 %v1807, %v1785
  %v1809 = vadd.f32 %v1808, %v1792
  %v1810 = vadd.f32 %v1809, %v1799
  %v1811 = vadd.f32 %v1810, %v1806
  %v1812 = vrot.slane %v1811, 4
  %v1813 = vadd.f32 %v1811, %v1812
  %v1814 = vrot.slane %v1813, 2
  %v1815 = vadd.f32 %v1813, %v1814
  %v1816 = vrot.slane %v1815, 1
  %v1817 = vadd.f32 %v1815, %v1816
  %v1818 = vmul.f32 %v1817, -0.5
  %v1819 = vmul.f32 %v1818, %v1210
  %v1820 = vsub.f32 %v1819, %v1211
  %v1821 = vlaneseq
  %v1822 = vand.u32 %v1821, 127
  %vm1823 = vcmp.eq.s32.totalorder %v1822, 0
  %v1824 = vsel %vm1823, %v1819, 0.0
  %vm1825 = vcmp.eq.s32.totalorder %v1822, 1
  %v1826 = vsel %vm1825, %v1211, %v1824
  %vm1827 = vcmp.eq.s32.totalorder %v1822, 2
  %v1828 = vsel %vm1827, %v1211, %v1826
  %vm1829 = vcmp.eq.s32.totalorder %v1822, 3
  %v1830 = vsel %vm1829, %v1820, %v1828
  %1831 = vst [vmem:[%s9] sm:$0x1] %v1830
  // Predicated region
  $region38: #{newtonian_vae_forward.1} parent=0 // pred_check
    _
  $region39: #{newtonian_vae_forward.1} parent=0 // pred_check_branch
    %1833 = sbr.rel (0) target = $region41
  $region40: #{newtonian_vae_forward.1} parent=0 // pred_region
    _
  $region41: #{newtonian_vae_forward.1} parent=0 // pred_fallthru
    _
  // Predicated region
  $region42: #{newtonian_vae_forward.1} parent=0 // pred_check
    _
  $region43: #{newtonian_vae_forward.1} parent=0 // pred_check_branch
    %1835 = sbr.rel (0) target = $region45
  $region44: #{newtonian_vae_forward.1} parent=0 // pred_region
    _
  $region45: #{newtonian_vae_forward.1} parent=0 // pred_fallthru
    _

</llo_original>
